<compile_context>
chip_gen: v5e
topology: v5e:2x2
jax: 0.10.0
libtpu: 0.0.40
codegen_flags: <defaults>
</compile_context>

<pallas_src>
import math

import jax
import jax.numpy as jnp
from jax.experimental import pallas as pl
from jax.experimental.pallas import tpu as pltpu

D_MODEL = 32
N_HEAD = 4
HEAD_DIM = D_MODEL // N_HEAD
D_FF = 64
NUM_LAYERS = 2
EPS = 1e-5


def _align128(n):
    return ((n + 127) // 128) * 128


# packed weight-slab column layout (128-lane-aligned sub-blocks)
_QKV_COLS = 3 * D_MODEL                  # 96   : [wq | wk | wv]
_W1_OFF = _align128(_QKV_COLS)           # 128  : w1 starts lane-aligned
_WD_COLS = _W1_OFF + D_FF                # 192
_PBLK = _align128(3 * D_MODEL)           # 128  : per-layer pos/bias block


def _layer_norm(x, gamma, beta):
    mu = jnp.mean(x, axis=-1, keepdims=True)
    var = jnp.mean(jnp.square(x - mu), axis=-1, keepdims=True)
    return (x - mu) * jax.lax.rsqrt(var + EPS) * gamma + beta


def _fused_encoder_kernel(src_ref, pos_ref,
                          wd_ref, wog_ref, wf_ref, wpos_ref,
                          bpos_ref, bd_ref, bf_ref,
                          out_ref):
    S, B, D = src_ref.shape
    BS = B * S
    L = wd_ref.shape[0]
    H = N_HEAD
    HD = D // H
    scale = 1.0 / math.sqrt(HD)

    # One relayout at entry (and one at exit): batched attention einsums need a
    # leading batch dim, so rows are kept batch-major inside the kernel.  Every
    # per-layer reshape below preserves the trailing (lane) dim.
    x = pltpu.einshape("sbd->bsd", src_ref[...]).reshape(BS, D)
    p_bf = pltpu.einshape("sbd->bsd", pos_ref[...]).reshape(BS, D).astype(jnp.bfloat16)

    # Hoisted: positional q/k contribution of EVERY layer in one MXU pass,
    # with the packed [bq|bk|bv] biases folded in.   (BS, L*_PBLK)
    pos_qkv = (jnp.dot(p_bf, wpos_ref[...], preferred_element_type=jnp.float32)
               + bpos_ref[...])

    for l in range(L):     # static unroll; fine at L=2 (fori_loop if this grows)
        w_qkv = wd_ref[l, :, 0:3 * D]                    # (D, 3D)  bf16
        w_1 = wd_ref[l, :, _W1_OFF:_W1_OFF + D_FF]       # (D, F)   bf16
        w_og = wog_ref[l]                                # (G, HD, D) bf16, g = h*B+b
        w_2 = wf_ref[l]                                  # (F, D)   bf16
        b_o, g1, be1, b_2, g2, be2 = [bd_ref[l, i:i + 1, :] for i in range(6)]
        b_1 = bf_ref[l]                                  # (1, F)

        # ---- fused q|k|v projection (one matmul) + hoisted pos/bias term ----
        qkv = (jnp.dot(x.astype(jnp.bfloat16), w_qkv,
                       preferred_element_type=jnp.float32)
               + pos_qkv[:, l * _PBLK:l * _PBLK + 3 * D])        # (BS, 3D) f32
        qkv_b = qkv.astype(jnp.bfloat16).reshape(B, S, 3 * D)    # (B, S, 3D)

        # ---- all heads batched into one leading dim g = h*B + b ----
        def heads(base):
            return jnp.concatenate(
                [qkv_b[:, :, base + h * HD: base + (h + 1) * HD]
                 for h in range(H)], axis=0)                     # (G, S, HD)

        qg, kg, vg = heads(0), heads(D), heads(2 * D)

        # single score einsum / softmax / weighted-value einsum for ALL heads
        s = jnp.einsum("gqd,gkd->gqk", qg, kg,
                       preferred_element_type=jnp.float32) * scale
        s = s - jnp.max(s, axis=-1, keepdims=True)
        e = jnp.exp(s)
        a = (e * pl.reciprocal(jnp.sum(e, axis=-1, keepdims=True), approx=True)
             ).astype(jnp.bfloat16)
        og = jnp.einsum("gqk,gkd->gqd", a, vg,
                        preferred_element_type=jnp.float32)      # (G, S, HD)

        # output projection: per-(head,batch) row-blocks of W_o, summed over heads
        proj = jnp.einsum("gsd,gde->gse", og.astype(jnp.bfloat16), w_og,
                          preferred_element_type=jnp.float32)    # (G, S, D)
        attn = jnp.sum(proj.reshape(H, B, S, D), axis=0).reshape(BS, D) + b_o

        # ---- residual + LayerNorm1 (dropout = identity in eval) ----
        x1 = _layer_norm(x + attn, g1, be1)

        # ---- feed-forward ----
        h1 = jnp.maximum(jnp.dot(x1.astype(jnp.bfloat16), w_1,
                                 preferred_element_type=jnp.float32) + b_1, 0.0)
        ff = jnp.dot(h1.astype(jnp.bfloat16), w_2,
                     preferred_element_type=jnp.float32) + b_2

        # ---- residual + LayerNorm2 ----
        x = _layer_norm(x1 + ff, g2, be2)

    # back to the module's seq-first (S, B, D) layout
    out_ref[...] = pltpu.einshape("bsd->sbd", x.reshape(B, S, D))


def pack_params(layer_params, batch):
    """Pack per-layer weights into a few VMEM-friendly slabs (bf16 for MXU)."""
    D, F, H, HD = D_MODEL, D_FF, N_HEAD, HEAD_DIM
    wd, wog, wf, wposl, bposl, bd, bf = [], [], [], [], [], [], []
    for p in layer_params:
        slab = jnp.zeros((D, _WD_COLS), jnp.float32)
        slab = slab.at[:, 0:3 * D].set(
            jnp.concatenate([p["wq"], p["wk"], p["wv"]], axis=1))
        slab = slab.at[:, _W1_OFF:_W1_OFF + F].set(p["w1"])
        wd.append(slab)

        wo_heads = p["wo"].reshape(H, HD, D)                   # row blocks of W_o
        wog.append(jnp.repeat(wo_heads, batch, axis=0))        # (G, HD, D), g=h*B+b

        wf.append(p["w2"])

        pblk = jnp.zeros((D, _PBLK), jnp.float32)
        pblk = pblk.at[:, 0:D].set(p["wq"]).at[:, D:2 * D].set(p["wk"])
        wposl.append(pblk)

        bblk = jnp.zeros((_PBLK,), jnp.float32)
        bblk = (bblk.at[0:D].set(p["bq"]).at[D:2 * D].set(p["bk"])
                .at[2 * D:3 * D].set(p["bv"]))
        bposl.append(bblk)

        bd.append(jnp.stack([p["bo"], p["g1"], p["be1"],
                             p["b2"], p["g2"], p["be2"]]))     # (6, D)
        bf.append(p["b1"][None, :])                            # (1, F)

    return dict(
        w_d=jnp.stack(wd).astype(jnp.bfloat16),                # (L, D, 192)
        w_og=jnp.stack(wog).astype(jnp.bfloat16),              # (L, G, HD, D)
        w_f=jnp.stack(wf).astype(jnp.bfloat16),                # (L, F, D)
        w_pos=jnp.concatenate(wposl, axis=1).astype(jnp.bfloat16),  # (D, L*128)
        b_pos=jnp.concatenate(bposl)[None, :],                 # (1, L*128) f32
        b_d=jnp.stack(bd),                                     # (L, 6, D)  f32
        b_f=jnp.stack(bf),                                     # (L, 1, F)  f32
    )


def transformer_encoder(src_sbd, pos_sbd, layer_params):
    """TransformerEncoder.forward(src, mask=None, src_key_padding_mask=None, pos=pos).

    src_sbd / pos_sbd: (S, B, D) float32, PyTorch seq-first convention.
    Whole encoder (all layers, whole batch) runs in one grid-less pallas_call.
    """
    S, B, D = src_sbd.shape
    packed = pack_params(layer_params, batch=B)
    args = [packed[k] for k in ("w_d", "w_og", "w_f", "w_pos", "b_pos", "b_d", "b_f")]
    vmem = pl.BlockSpec(memory_space=pltpu.MemorySpace.VMEM)
    return pl.pallas_call(
        _fused_encoder_kernel,
        out_shape=jax.ShapeDtypeStruct((S, B, D), jnp.float32),
        in_specs=[vmem] * (2 + len(args)),
        out_specs=vmem,
    )(src_sbd, pos_sbd, *args)


# ------------------------- pure-JAX f32 reference ---------------------------
def _ref_layer(x, p, prm):
    qk = x + p
    q = qk @ prm["wq"] + prm["bq"]
    k = qk @ prm["wk"] + prm["bk"]
    v = x @ prm["wv"] + prm["bv"]
    B, S, D = x.shape

    def heads(t):
        return t.reshape(B, S, N_HEAD, HEAD_DIM).transpose(0, 2, 1, 3)

    qh, kh, vh = heads(q), heads(k), heads(v)
    s = jnp.einsum("bhqd,bhkd->bhqk", qh, kh) / math.sqrt(HEAD_DIM)
    a = jax.nn.softmax(s, axis=-1)
    o = jnp.einsum("bhqk,bhkd->bhqd", a, vh).transpose(0, 2, 1, 3).reshape(B, S, D)
    o = o @ prm["wo"] + prm["bo"]

    def ln(t, g, b):
        mu = t.mean(-1, keepdims=True)
        var = ((t - mu) ** 2).mean(-1, keepdims=True)
        return (t - mu) * jax.lax.rsqrt(var + EPS) * g + b

    x1 = ln(x + o, prm["g1"], prm["be1"])
    ff = jnp.maximum(x1 @ prm["w1"] + prm["b1"], 0.0) @ prm["w2"] + prm["b2"]
    return ln(x1 + ff, prm["g2"], prm["be2"])


def _ref_encoder(src_sbd, pos_sbd, layer_params):
    out = jnp.transpose(src_sbd, (1, 0, 2))
    pos = jnp.transpose(pos_sbd, (1, 0, 2))
    for prm in layer_params:
        out = _ref_layer(out, pos, prm)
    return jnp.transpose(out, (1, 0, 2))


# ------------------------- deterministic init -------------------------------
def init_layer_params(key, num_layers):
    layers = []
    for l in range(num_layers):
        k = jax.random.fold_in(key, l)
        ks = jax.random.split(k, 16)

        def rnd(kk, shape, s=0.05):
            return (s * jax.random.normal(kk, shape)).astype(jnp.float32)

        prm = dict(
            wq=rnd(ks[0], (D_MODEL, D_MODEL)), bq=rnd(ks[1], (D_MODEL,), 0.01),
            wk=rnd(ks[2], (D_MODEL, D_MODEL)), bk=rnd(ks[3], (D_MODEL,), 0.01),
            wv=rnd(ks[4], (D_MODEL, D_MODEL)), bv=rnd(ks[5], (D_MODEL,), 0.01),
            wo=rnd(ks[6], (D_MODEL, D_MODEL)), bo=rnd(ks[7], (D_MODEL,), 0.01),
            w1=rnd(ks[8], (D_MODEL, D_FF)),    b1=rnd(ks[9], (D_FF,), 0.01),
            w2=rnd(ks[10], (D_FF, D_MODEL)),   b2=rnd(ks[11], (D_MODEL,), 0.01),
            g1=1.0 + rnd(ks[12], (D_MODEL,), 0.1), be1=rnd(ks[13], (D_MODEL,), 0.01),
            g2=1.0 + rnd(ks[14], (D_MODEL,), 0.1), be2=rnd(ks[15], (D_MODEL,), 0.01),
        )
        layers.append(prm)
    return layers


if __name__ == "__main__":
    key = jax.random.PRNGKey(0)
    k_src, k_pos, k_par = jax.random.split(key, 3)

    S, B = 8, 2
    src = jax.random.normal(k_src, (S, B, D_MODEL), dtype=jnp.float32)
    pos = jax.random.normal(k_pos, (S, B, D_MODEL), dtype=jnp.float32)
    layer_params = init_layer_params(k_par, NUM_LAYERS)

    out = jax.block_until_ready(transformer_encoder(src, pos, layer_params))
    ref = jax.block_until_ready(_ref_encoder(src, pos, layer_params))

    assert out.shape == (S, B, D_MODEL)
    # bf16 MXU operands + approx softmax reciprocal vs a pure-f32 reference.
    err = float(jnp.max(jnp.abs(out - ref)))
    assert jnp.allclose(out, ref, rtol=1e-2, atol=1e-2), err

    print("KERNEL_OK")
</pallas_src>

<mosaic_0001>
module attributes {stable_mosaic.version = 11 : i64} {
  func.func @_fused_encoder_kernel(%arg0: memref<8x2x32xf32, #tpu.memory_space<vmem>>, %arg1: memref<8x2x32xf32, #tpu.memory_space<vmem>>, %arg2: memref<2x32x192xbf16, #tpu.memory_space<vmem>>, %arg3: memref<2x8x8x32xbf16, #tpu.memory_space<vmem>>, %arg4: memref<2x64x32xbf16, #tpu.memory_space<vmem>>, %arg5: memref<32x256xbf16, #tpu.memory_space<vmem>>, %arg6: memref<1x256xf32, #tpu.memory_space<vmem>>, %arg7: memref<2x6x32xf32, #tpu.memory_space<vmem>>, %arg8: memref<2x1x64xf32, #tpu.memory_space<vmem>>, %arg9: memref<8x2x32xf32, #tpu.memory_space<vmem>>) attributes {dimension_semantics = [], scalar_prefetch = 0 : i64, scratch_operands = 0 : i64, tpu.core_type = #tpu.core_type<tc>} {
    %c0 = arith.constant 0 : index
    %c0_0 = arith.constant 0 : index
    %c0_1 = arith.constant 0 : index
    %0 = vector.load %arg0[%c0, %c0_0, %c0_1] : memref<8x2x32xf32, #tpu.memory_space<vmem>>, vector<8x2x32xf32>
    %1 = tpu.transpose %0, [1, 0, 2] : vector<8x2x32xf32> -> vector<2x8x32xf32>
    %2 = vector.shape_cast %1 : vector<2x8x32xf32> to vector<16x32xf32>
    %c0_2 = arith.constant 0 : index
    %c0_3 = arith.constant 0 : index
    %c0_4 = arith.constant 0 : index
    %3 = vector.load %arg1[%c0_2, %c0_3, %c0_4] : memref<8x2x32xf32, #tpu.memory_space<vmem>>, vector<8x2x32xf32>
    %4 = tpu.transpose %3, [1, 0, 2] : vector<8x2x32xf32> -> vector<2x8x32xf32>
    %5 = vector.shape_cast %4 : vector<2x8x32xf32> to vector<16x32xf32>
    %6 = arith.truncf %5 : vector<16x32xf32> to vector<16x32xbf16>
    %c0_5 = arith.constant 0 : index
    %c0_6 = arith.constant 0 : index
    %7 = vector.load %arg5[%c0_5, %c0_6] : memref<32x256xbf16, #tpu.memory_space<vmem>>, vector<32x256xbf16>
    %cst = arith.constant dense<0.000000e+00> : vector<16x256xf32>
    %8 = tpu.matmul %6, %7, %cst {dimension_numbers = #tpu.dot_dimension_numbers<[1], [0], [0], [1], [0, 0, 1, 1], [], []>} : vector<16x32xbf16>, vector<32x256xbf16>, vector<16x256xf32> -> vector<16x256xf32>
    %c0_7 = arith.constant 0 : index
    %c0_8 = arith.constant 0 : index
    %9 = vector.load %arg6[%c0_7, %c0_8] : memref<1x256xf32, #tpu.memory_space<vmem>>, vector<1x256xf32>
    %10 = vector.broadcast %9 : vector<1x256xf32> to vector<16x256xf32>
    %11 = arith.addf %8, %10 : vector<16x256xf32>
    %c0_9 = arith.constant 0 : index
    %c0_10 = arith.constant 0 : index
    %c0_11 = arith.constant 0 : index
    %12 = vector.load %arg2[%c0_9, %c0_10, %c0_11] : memref<2x32x192xbf16, #tpu.memory_space<vmem>>, vector<1x32x96xbf16>
    %13 = vector.shape_cast %12 : vector<1x32x96xbf16> to vector<32x96xbf16>
    %c0_12 = arith.constant 0 : index
    %c0_13 = arith.constant 0 : index
    %c128 = arith.constant 128 : index
    %14 = vector.load %arg2[%c0_12, %c0_13, %c128] : memref<2x32x192xbf16, #tpu.memory_space<vmem>>, vector<1x32x64xbf16>
    %15 = vector.shape_cast %14 : vector<1x32x64xbf16> to vector<32x64xbf16>
    %c0_14 = arith.constant 0 : index
    %c0_15 = arith.constant 0 : index
    %c0_16 = arith.constant 0 : index
    %c0_17 = arith.constant 0 : index
    %16 = vector.load %arg3[%c0_14, %c0_15, %c0_16, %c0_17] : memref<2x8x8x32xbf16, #tpu.memory_space<vmem>>, vector<1x8x8x32xbf16>
    %17 = vector.shape_cast %16 : vector<1x8x8x32xbf16> to vector<8x8x32xbf16>
    %c0_18 = arith.constant 0 : index
    %c0_19 = arith.constant 0 : index
    %c0_20 = arith.constant 0 : index
    %18 = vector.load %arg4[%c0_18, %c0_19, %c0_20] : memref<2x64x32xbf16, #tpu.memory_space<vmem>>, vector<1x64x32xbf16>
    %19 = vector.shape_cast %18 : vector<1x64x32xbf16> to vector<64x32xbf16>
    %c0_21 = arith.constant 0 : index
    %c0_22 = arith.constant 0 : index
    %c0_23 = arith.constant 0 : index
    %20 = vector.load %arg7[%c0_21, %c0_22, %c0_23] : memref<2x6x32xf32, #tpu.memory_space<vmem>>, vector<1x1x32xf32>
    %21 = vector.shape_cast %20 : vector<1x1x32xf32> to vector<1x32xf32>
    %c0_24 = arith.constant 0 : index
    %c1 = arith.constant 1 : index
    %c0_25 = arith.constant 0 : index
    %22 = vector.load %arg7[%c0_24, %c1, %c0_25] : memref<2x6x32xf32, #tpu.memory_space<vmem>>, vector<1x1x32xf32>
    %23 = vector.shape_cast %22 : vector<1x1x32xf32> to vector<1x32xf32>
    %c0_26 = arith.constant 0 : index
    %c2 = arith.constant 2 : index
    %c0_27 = arith.constant 0 : index
    %24 = vector.load %arg7[%c0_26, %c2, %c0_27] : memref<2x6x32xf32, #tpu.memory_space<vmem>>, vector<1x1x32xf32>
    %25 = vector.shape_cast %24 : vector<1x1x32xf32> to vector<1x32xf32>
    %c0_28 = arith.constant 0 : index
    %c3 = arith.constant 3 : index
    %c0_29 = arith.constant 0 : index
    %26 = vector.load %arg7[%c0_28, %c3, %c0_29] : memref<2x6x32xf32, #tpu.memory_space<vmem>>, vector<1x1x32xf32>
    %27 = vector.shape_cast %26 : vector<1x1x32xf32> to vector<1x32xf32>
    %c0_30 = arith.constant 0 : index
    %c4 = arith.constant 4 : index
    %c0_31 = arith.constant 0 : index
    %28 = vector.load %arg7[%c0_30, %c4, %c0_31] : memref<2x6x32xf32, #tpu.memory_space<vmem>>, vector<1x1x32xf32>
    %29 = vector.shape_cast %28 : vector<1x1x32xf32> to vector<1x32xf32>
    %c0_32 = arith.constant 0 : index
    %c5 = arith.constant 5 : index
    %c0_33 = arith.constant 0 : index
    %30 = vector.load %arg7[%c0_32, %c5, %c0_33] : memref<2x6x32xf32, #tpu.memory_space<vmem>>, vector<1x1x32xf32>
    %31 = vector.shape_cast %30 : vector<1x1x32xf32> to vector<1x32xf32>
    %c0_34 = arith.constant 0 : index
    %c0_35 = arith.constant 0 : index
    %c0_36 = arith.constant 0 : index
    %32 = vector.load %arg8[%c0_34, %c0_35, %c0_36] : memref<2x1x64xf32, #tpu.memory_space<vmem>>, vector<1x1x64xf32>
    %33 = vector.shape_cast %32 : vector<1x1x64xf32> to vector<1x64xf32>
    %34 = arith.truncf %2 : vector<16x32xf32> to vector<16x32xbf16>
    %cst_37 = arith.constant dense<0.000000e+00> : vector<16x96xf32>
    %35 = tpu.matmul %34, %13, %cst_37 {dimension_numbers = #tpu.dot_dimension_numbers<[1], [0], [0], [1], [0, 0, 1, 1], [], []>} : vector<16x32xbf16>, vector<32x96xbf16>, vector<16x96xf32> -> vector<16x96xf32>
    %36 = vector.extract_strided_slice %11 {offsets = [0, 0], sizes = [16, 96], strides = [1, 1]} : vector<16x256xf32> to vector<16x96xf32>
    %37 = arith.addf %35, %36 : vector<16x96xf32>
    %38 = arith.truncf %37 : vector<16x96xf32> to vector<16x96xbf16>
    %39 = vector.shape_cast %38 : vector<16x96xbf16> to vector<2x8x96xbf16>
    %40 = vector.extract_strided_slice %39 {offsets = [0, 0, 0], sizes = [2, 8, 8], strides = [1, 1, 1]} : vector<2x8x96xbf16> to vector<2x8x8xbf16>
    %41 = vector.extract_strided_slice %39 {offsets = [0, 0, 8], sizes = [2, 8, 8], strides = [1, 1, 1]} : vector<2x8x96xbf16> to vector<2x8x8xbf16>
    %42 = vector.extract_strided_slice %39 {offsets = [0, 0, 16], sizes = [2, 8, 8], strides = [1, 1, 1]} : vector<2x8x96xbf16> to vector<2x8x8xbf16>
    %43 = vector.extract_strided_slice %39 {offsets = [0, 0, 24], sizes = [2, 8, 8], strides = [1, 1, 1]} : vector<2x8x96xbf16> to vector<2x8x8xbf16>
    %44 = tpu.concatenate %40, %41, %42, %43 in 0 : vector<2x8x8xbf16>, vector<2x8x8xbf16>, vector<2x8x8xbf16>, vector<2x8x8xbf16> -> vector<8x8x8xbf16>
    %45 = vector.extract_strided_slice %39 {offsets = [0, 0, 32], sizes = [2, 8, 8], strides = [1, 1, 1]} : vector<2x8x96xbf16> to vector<2x8x8xbf16>
    %46 = vector.extract_strided_slice %39 {offsets = [0, 0, 40], sizes = [2, 8, 8], strides = [1, 1, 1]} : vector<2x8x96xbf16> to vector<2x8x8xbf16>
    %47 = vector.extract_strided_slice %39 {offsets = [0, 0, 48], sizes = [2, 8, 8], strides = [1, 1, 1]} : vector<2x8x96xbf16> to vector<2x8x8xbf16>
    %48 = vector.extract_strided_slice %39 {offsets = [0, 0, 56], sizes = [2, 8, 8], strides = [1, 1, 1]} : vector<2x8x96xbf16> to vector<2x8x8xbf16>
    %49 = tpu.concatenate %45, %46, %47, %48 in 0 : vector<2x8x8xbf16>, vector<2x8x8xbf16>, vector<2x8x8xbf16>, vector<2x8x8xbf16> -> vector<8x8x8xbf16>
    %50 = vector.extract_strided_slice %39 {offsets = [0, 0, 64], sizes = [2, 8, 8], strides = [1, 1, 1]} : vector<2x8x96xbf16> to vector<2x8x8xbf16>
    %51 = vector.extract_strided_slice %39 {offsets = [0, 0, 72], sizes = [2, 8, 8], strides = [1, 1, 1]} : vector<2x8x96xbf16> to vector<2x8x8xbf16>
    %52 = vector.extract_strided_slice %39 {offsets = [0, 0, 80], sizes = [2, 8, 8], strides = [1, 1, 1]} : vector<2x8x96xbf16> to vector<2x8x8xbf16>
    %53 = vector.extract_strided_slice %39 {offsets = [0, 0, 88], sizes = [2, 8, 8], strides = [1, 1, 1]} : vector<2x8x96xbf16> to vector<2x8x8xbf16>
    %54 = tpu.concatenate %50, %51, %52, %53 in 0 : vector<2x8x8xbf16>, vector<2x8x8xbf16>, vector<2x8x8xbf16>, vector<2x8x8xbf16> -> vector<8x8x8xbf16>
    "tpu.trace_start"() <{level = 10 : i32, message = "gqd,gkd->gqk"}> : () -> ()
    %cst_38 = arith.constant dense<0.000000e+00> : vector<8x8x8xf32>
    %55 = tpu.matmul %44, %49, %cst_38 {dimension_numbers = #tpu.dot_dimension_numbers<[2], [2], [1], [1], [0, 0, 0, 1, 1, 1], [0], [0]>} : vector<8x8x8xbf16>, vector<8x8x8xbf16>, vector<8x8x8xf32> -> vector<8x8x8xf32>
    "tpu.trace_stop"() : () -> ()
    %cst_39 = arith.constant 0.353553385 : f32
    %56 = vector.broadcast %cst_39 : f32 to vector<8x8x8xf32>
    %57 = arith.mulf %55, %56 : vector<8x8x8xf32>
    %cst_40 = arith.constant dense<0xFF800000> : vector<8x8xf32>
    %58 = vector.multi_reduction <maximumf>, %57, %cst_40 [2] : vector<8x8x8xf32> to vector<8x8xf32>
    %59 = vector.shape_cast %58 : vector<8x8xf32> to vector<8x8x1xf32>
    %60 = vector.broadcast %59 : vector<8x8x1xf32> to vector<8x8x8xf32>
    %61 = arith.subf %57, %60 : vector<8x8x8xf32>
    %62 = math.exp %61 : vector<8x8x8xf32>
    %cst_41 = arith.constant dense<0.000000e+00> : vector<8x8xf32>
    %63 = vector.multi_reduction <add>, %62, %cst_41 [2] : vector<8x8x8xf32> to vector<8x8xf32>
    %64 = vector.shape_cast %63 : vector<8x8xf32> to vector<8x8x1xf32>
    %65 = tpu.reciprocal %64 {approx = true} : vector<8x8x1xf32> -> vector<8x8x1xf32>
    %66 = vector.broadcast %65 : vector<8x8x1xf32> to vector<8x8x8xf32>
    %67 = arith.mulf %62, %66 : vector<8x8x8xf32>
    %68 = arith.truncf %67 : vector<8x8x8xf32> to vector<8x8x8xbf16>
    "tpu.trace_start"() <{level = 10 : i32, message = "gqk,gkd->gqd"}> : () -> ()
    %cst_42 = arith.constant dense<0.000000e+00> : vector<8x8x8xf32>
    %69 = tpu.matmul %68, %54, %cst_42 {dimension_numbers = #tpu.dot_dimension_numbers<[2], [1], [1], [2], [0, 0, 0, 1, 1, 2], [0], [0]>} : vector<8x8x8xbf16>, vector<8x8x8xbf16>, vector<8x8x8xf32> -> vector<8x8x8xf32>
    "tpu.trace_stop"() : () -> ()
    %70 = arith.truncf %69 : vector<8x8x8xf32> to vector<8x8x8xbf16>
    "tpu.trace_start"() <{level = 10 : i32, message = "gsd,gde->gse"}> : () -> ()
    %cst_43 = arith.constant dense<0.000000e+00> : vector<8x8x32xf32>
    %71 = tpu.matmul %70, %17, %cst_43 {dimension_numbers = #tpu.dot_dimension_numbers<[2], [1], [1], [2], [0, 0, 0, 1, 1, 2], [0], [0]>} : vector<8x8x8xbf16>, vector<8x8x32xbf16>, vector<8x8x32xf32> -> vector<8x8x32xf32>
    "tpu.trace_stop"() : () -> ()
    %72 = vector.shape_cast %71 : vector<8x8x32xf32> to vector<4x2x8x32xf32>
    %cst_44 = arith.constant dense<0.000000e+00> : vector<2x8x32xf32>
    %73 = vector.multi_reduction <add>, %72, %cst_44 [0] : vector<4x2x8x32xf32> to vector<2x8x32xf32>
    %74 = vector.shape_cast %73 : vector<2x8x32xf32> to vector<16x32xf32>
    %75 = vector.broadcast %21 : vector<1x32xf32> to vector<16x32xf32>
    %76 = arith.addf %74, %75 : vector<16x32xf32>
    %77 = arith.addf %2, %76 : vector<16x32xf32>
    %cst_45 = arith.constant dense<0.000000e+00> : vector<16xf32>
    %78 = vector.multi_reduction <add>, %77, %cst_45 [1] : vector<16x32xf32> to vector<16xf32>
    %79 = vector.shape_cast %78 : vector<16xf32> to vector<16x1xf32>
    %cst_46 = arith.constant 3.200000e+01 : f32
    %80 = vector.broadcast %cst_46 : f32 to vector<16x1xf32>
    %81 = arith.divf %79, %80 : vector<16x1xf32>
    %82 = vector.broadcast %81 : vector<16x1xf32> to vector<16x32xf32>
    %83 = arith.subf %77, %82 : vector<16x32xf32>
    %84 = arith.mulf %83, %83 : vector<16x32xf32>
    %cst_47 = arith.constant dense<0.000000e+00> : vector<16xf32>
    %85 = vector.multi_reduction <add>, %84, %cst_47 [1] : vector<16x32xf32> to vector<16xf32>
    %86 = vector.shape_cast %85 : vector<16xf32> to vector<16x1xf32>
    %cst_48 = arith.constant 3.200000e+01 : f32
    %87 = vector.broadcast %cst_48 : f32 to vector<16x1xf32>
    %88 = arith.divf %86, %87 : vector<16x1xf32>
    %89 = vector.broadcast %81 : vector<16x1xf32> to vector<16x32xf32>
    %90 = arith.subf %77, %89 : vector<16x32xf32>
    %cst_49 = arith.constant 9.99999974E-6 : f32
    %91 = vector.broadcast %cst_49 : f32 to vector<16x1xf32>
    %92 = arith.addf %88, %91 : vector<16x1xf32>
    %93 = math.rsqrt %92 : vector<16x1xf32>
    %94 = vector.broadcast %93 : vector<16x1xf32> to vector<16x32xf32>
    %95 = arith.mulf %90, %94 : vector<16x32xf32>
    %96 = vector.broadcast %23 : vector<1x32xf32> to vector<16x32xf32>
    %97 = arith.mulf %95, %96 : vector<16x32xf32>
    %98 = vector.broadcast %25 : vector<1x32xf32> to vector<16x32xf32>
    %99 = arith.addf %97, %98 : vector<16x32xf32>
    %100 = arith.truncf %99 : vector<16x32xf32> to vector<16x32xbf16>
    %cst_50 = arith.constant dense<0.000000e+00> : vector<16x64xf32>
    %101 = tpu.matmul %100, %15, %cst_50 {dimension_numbers = #tpu.dot_dimension_numbers<[1], [0], [0], [1], [0, 0, 1, 1], [], []>} : vector<16x32xbf16>, vector<32x64xbf16>, vector<16x64xf32> -> vector<16x64xf32>
    %102 = vector.broadcast %33 : vector<1x64xf32> to vector<16x64xf32>
    %103 = arith.addf %101, %102 : vector<16x64xf32>
    %cst_51 = arith.constant 0.000000e+00 : f32
    %104 = vector.broadcast %cst_51 : f32 to vector<16x64xf32>
    %105 = arith.maximumf %103, %104 : vector<16x64xf32>
    %106 = arith.truncf %105 : vector<16x64xf32> to vector<16x64xbf16>
    %cst_52 = arith.constant dense<0.000000e+00> : vector<16x32xf32>
    %107 = tpu.matmul %106, %19, %cst_52 {dimension_numbers = #tpu.dot_dimension_numbers<[1], [0], [0], [1], [0, 0, 1, 1], [], []>} : vector<16x64xbf16>, vector<64x32xbf16>, vector<16x32xf32> -> vector<16x32xf32>
    %108 = vector.broadcast %27 : vector<1x32xf32> to vector<16x32xf32>
    %109 = arith.addf %107, %108 : vector<16x32xf32>
    %110 = arith.addf %99, %109 : vector<16x32xf32>
    %cst_53 = arith.constant dense<0.000000e+00> : vector<16xf32>
    %111 = vector.multi_reduction <add>, %110, %cst_53 [1] : vector<16x32xf32> to vector<16xf32>
    %112 = vector.shape_cast %111 : vector<16xf32> to vector<16x1xf32>
    %cst_54 = arith.constant 3.200000e+01 : f32
    %113 = vector.broadcast %cst_54 : f32 to vector<16x1xf32>
    %114 = arith.divf %112, %113 : vector<16x1xf32>
    %115 = vector.broadcast %114 : vector<16x1xf32> to vector<16x32xf32>
    %116 = arith.subf %110, %115 : vector<16x32xf32>
    %117 = arith.mulf %116, %116 : vector<16x32xf32>
    %cst_55 = arith.constant dense<0.000000e+00> : vector<16xf32>
    %118 = vector.multi_reduction <add>, %117, %cst_55 [1] : vector<16x32xf32> to vector<16xf32>
    %119 = vector.shape_cast %118 : vector<16xf32> to vector<16x1xf32>
    %cst_56 = arith.constant 3.200000e+01 : f32
    %120 = vector.broadcast %cst_56 : f32 to vector<16x1xf32>
    %121 = arith.divf %119, %120 : vector<16x1xf32>
    %122 = vector.broadcast %114 : vector<16x1xf32> to vector<16x32xf32>
    %123 = arith.subf %110, %122 : vector<16x32xf32>
    %cst_57 = arith.constant 9.99999974E-6 : f32
    %124 = vector.broadcast %cst_57 : f32 to vector<16x1xf32>
    %125 = arith.addf %121, %124 : vector<16x1xf32>
    %126 = math.rsqrt %125 : vector<16x1xf32>
    %127 = vector.broadcast %126 : vector<16x1xf32> to vector<16x32xf32>
    %128 = arith.mulf %123, %127 : vector<16x32xf32>
    %129 = vector.broadcast %29 : vector<1x32xf32> to vector<16x32xf32>
    %130 = arith.mulf %128, %129 : vector<16x32xf32>
    %131 = vector.broadcast %31 : vector<1x32xf32> to vector<16x32xf32>
    %132 = arith.addf %130, %131 : vector<16x32xf32>
    %c1_58 = arith.constant 1 : index
    %c0_59 = arith.constant 0 : index
    %c0_60 = arith.constant 0 : index
    %133 = vector.load %arg2[%c1_58, %c0_59, %c0_60] : memref<2x32x192xbf16, #tpu.memory_space<vmem>>, vector<1x32x96xbf16>
    %134 = vector.shape_cast %133 : vector<1x32x96xbf16> to vector<32x96xbf16>
    %c1_61 = arith.constant 1 : index
    %c0_62 = arith.constant 0 : index
    %c128_63 = arith.constant 128 : index
    %135 = vector.load %arg2[%c1_61, %c0_62, %c128_63] : memref<2x32x192xbf16, #tpu.memory_space<vmem>>, vector<1x32x64xbf16>
    %136 = vector.shape_cast %135 : vector<1x32x64xbf16> to vector<32x64xbf16>
    %c1_64 = arith.constant 1 : index
    %c0_65 = arith.constant 0 : index
    %c0_66 = arith.constant 0 : index
    %c0_67 = arith.constant 0 : index
    %137 = vector.load %arg3[%c1_64, %c0_65, %c0_66, %c0_67] : memref<2x8x8x32xbf16, #tpu.memory_space<vmem>>, vector<1x8x8x32xbf16>
    %138 = vector.shape_cast %137 : vector<1x8x8x32xbf16> to vector<8x8x32xbf16>
    %c1_68 = arith.constant 1 : index
    %c0_69 = arith.constant 0 : index
    %c0_70 = arith.constant 0 : index
    %139 = vector.load %arg4[%c1_68, %c0_69, %c0_70] : memref<2x64x32xbf16, #tpu.memory_space<vmem>>, vector<1x64x32xbf16>
    %140 = vector.shape_cast %139 : vector<1x64x32xbf16> to vector<64x32xbf16>
    %c1_71 = arith.constant 1 : index
    %c0_72 = arith.constant 0 : index
    %c0_73 = arith.constant 0 : index
    %141 = vector.load %arg7[%c1_71, %c0_72, %c0_73] : memref<2x6x32xf32, #tpu.memory_space<vmem>>, vector<1x1x32xf32>
    %142 = vector.shape_cast %141 : vector<1x1x32xf32> to vector<1x32xf32>
    %c1_74 = arith.constant 1 : index
    %c1_75 = arith.constant 1 : index
    %c0_76 = arith.constant 0 : index
    %143 = vector.load %arg7[%c1_74, %c1_75, %c0_76] : memref<2x6x32xf32, #tpu.memory_space<vmem>>, vector<1x1x32xf32>
    %144 = vector.shape_cast %143 : vector<1x1x32xf32> to vector<1x32xf32>
    %c1_77 = arith.constant 1 : index
    %c2_78 = arith.constant 2 : index
    %c0_79 = arith.constant 0 : index
    %145 = vector.load %arg7[%c1_77, %c2_78, %c0_79] : memref<2x6x32xf32, #tpu.memory_space<vmem>>, vector<1x1x32xf32>
    %146 = vector.shape_cast %145 : vector<1x1x32xf32> to vector<1x32xf32>
    %c1_80 = arith.constant 1 : index
    %c3_81 = arith.constant 3 : index
    %c0_82 = arith.constant 0 : index
    %147 = vector.load %arg7[%c1_80, %c3_81, %c0_82] : memref<2x6x32xf32, #tpu.memory_space<vmem>>, vector<1x1x32xf32>
    %148 = vector.shape_cast %147 : vector<1x1x32xf32> to vector<1x32xf32>
    %c1_83 = arith.constant 1 : index
    %c4_84 = arith.constant 4 : index
    %c0_85 = arith.constant 0 : index
    %149 = vector.load %arg7[%c1_83, %c4_84, %c0_85] : memref<2x6x32xf32, #tpu.memory_space<vmem>>, vector<1x1x32xf32>
    %150 = vector.shape_cast %149 : vector<1x1x32xf32> to vector<1x32xf32>
    %c1_86 = arith.constant 1 : index
    %c5_87 = arith.constant 5 : index
    %c0_88 = arith.constant 0 : index
    %151 = vector.load %arg7[%c1_86, %c5_87, %c0_88] : memref<2x6x32xf32, #tpu.memory_space<vmem>>, vector<1x1x32xf32>
    %152 = vector.shape_cast %151 : vector<1x1x32xf32> to vector<1x32xf32>
    %c1_89 = arith.constant 1 : index
    %c0_90 = arith.constant 0 : index
    %c0_91 = arith.constant 0 : index
    %153 = vector.load %arg8[%c1_89, %c0_90, %c0_91] : memref<2x1x64xf32, #tpu.memory_space<vmem>>, vector<1x1x64xf32>
    %154 = vector.shape_cast %153 : vector<1x1x64xf32> to vector<1x64xf32>
    %155 = arith.truncf %132 : vector<16x32xf32> to vector<16x32xbf16>
    %cst_92 = arith.constant dense<0.000000e+00> : vector<16x96xf32>
    %156 = tpu.matmul %155, %134, %cst_92 {dimension_numbers = #tpu.dot_dimension_numbers<[1], [0], [0], [1], [0, 0, 1, 1], [], []>} : vector<16x32xbf16>, vector<32x96xbf16>, vector<16x96xf32> -> vector<16x96xf32>
    %157 = vector.extract_strided_slice %11 {offsets = [0, 128], sizes = [16, 96], strides = [1, 1]} : vector<16x256xf32> to vector<16x96xf32>
    %158 = arith.addf %156, %157 : vector<16x96xf32>
    %159 = arith.truncf %158 : vector<16x96xf32> to vector<16x96xbf16>
    %160 = vector.shape_cast %159 : vector<16x96xbf16> to vector<2x8x96xbf16>
    %161 = vector.extract_strided_slice %160 {offsets = [0, 0, 0], sizes = [2, 8, 8], strides = [1, 1, 1]} : vector<2x8x96xbf16> to vector<2x8x8xbf16>
    %162 = vector.extract_strided_slice %160 {offsets = [0, 0, 8], sizes = [2, 8, 8], strides = [1, 1, 1]} : vector<2x8x96xbf16> to vector<2x8x8xbf16>
    %163 = vector.extract_strided_slice %160 {offsets = [0, 0, 16], sizes = [2, 8, 8], strides = [1, 1, 1]} : vector<2x8x96xbf16> to vector<2x8x8xbf16>
    %164 = vector.extract_strided_slice %160 {offsets = [0, 0, 24], sizes = [2, 8, 8], strides = [1, 1, 1]} : vector<2x8x96xbf16> to vector<2x8x8xbf16>
    %165 = tpu.concatenate %161, %162, %163, %164 in 0 : vector<2x8x8xbf16>, vector<2x8x8xbf16>, vector<2x8x8xbf16>, vector<2x8x8xbf16> -> vector<8x8x8xbf16>
    %166 = vector.extract_strided_slice %160 {offsets = [0, 0, 32], sizes = [2, 8, 8], strides = [1, 1, 1]} : vector<2x8x96xbf16> to vector<2x8x8xbf16>
    %167 = vector.extract_strided_slice %160 {offsets = [0, 0, 40], sizes = [2, 8, 8], strides = [1, 1, 1]} : vector<2x8x96xbf16> to vector<2x8x8xbf16>
    %168 = vector.extract_strided_slice %160 {offsets = [0, 0, 48], sizes = [2, 8, 8], strides = [1, 1, 1]} : vector<2x8x96xbf16> to vector<2x8x8xbf16>
    %169 = vector.extract_strided_slice %160 {offsets = [0, 0, 56], sizes = [2, 8, 8], strides = [1, 1, 1]} : vector<2x8x96xbf16> to vector<2x8x8xbf16>
    %170 = tpu.concatenate %166, %167, %168, %169 in 0 : vector<2x8x8xbf16>, vector<2x8x8xbf16>, vector<2x8x8xbf16>, vector<2x8x8xbf16> -> vector<8x8x8xbf16>
    %171 = vector.extract_strided_slice %160 {offsets = [0, 0, 64], sizes = [2, 8, 8], strides = [1, 1, 1]} : vector<2x8x96xbf16> to vector<2x8x8xbf16>
    %172 = vector.extract_strided_slice %160 {offsets = [0, 0, 72], sizes = [2, 8, 8], strides = [1, 1, 1]} : vector<2x8x96xbf16> to vector<2x8x8xbf16>
    %173 = vector.extract_strided_slice %160 {offsets = [0, 0, 80], sizes = [2, 8, 8], strides = [1, 1, 1]} : vector<2x8x96xbf16> to vector<2x8x8xbf16>
    %174 = vector.extract_strided_slice %160 {offsets = [0, 0, 88], sizes = [2, 8, 8], strides = [1, 1, 1]} : vector<2x8x96xbf16> to vector<2x8x8xbf16>
    %175 = tpu.concatenate %171, %172, %173, %174 in 0 : vector<2x8x8xbf16>, vector<2x8x8xbf16>, vector<2x8x8xbf16>, vector<2x8x8xbf16> -> vector<8x8x8xbf16>
    "tpu.trace_start"() <{level = 10 : i32, message = "gqd,gkd->gqk"}> : () -> ()
    %cst_93 = arith.constant dense<0.000000e+00> : vector<8x8x8xf32>
    %176 = tpu.matmul %165, %170, %cst_93 {dimension_numbers = #tpu.dot_dimension_numbers<[2], [2], [1], [1], [0, 0, 0, 1, 1, 1], [0], [0]>} : vector<8x8x8xbf16>, vector<8x8x8xbf16>, vector<8x8x8xf32> -> vector<8x8x8xf32>
    "tpu.trace_stop"() : () -> ()
    %cst_94 = arith.constant 0.353553385 : f32
    %177 = vector.broadcast %cst_94 : f32 to vector<8x8x8xf32>
    %178 = arith.mulf %176, %177 : vector<8x8x8xf32>
    %cst_95 = arith.constant dense<0xFF800000> : vector<8x8xf32>
    %179 = vector.multi_reduction <maximumf>, %178, %cst_95 [2] : vector<8x8x8xf32> to vector<8x8xf32>
    %180 = vector.shape_cast %179 : vector<8x8xf32> to vector<8x8x1xf32>
    %181 = vector.broadcast %180 : vector<8x8x1xf32> to vector<8x8x8xf32>
    %182 = arith.subf %178, %181 : vector<8x8x8xf32>
    %183 = math.exp %182 : vector<8x8x8xf32>
    %cst_96 = arith.constant dense<0.000000e+00> : vector<8x8xf32>
    %184 = vector.multi_reduction <add>, %183, %cst_96 [2] : vector<8x8x8xf32> to vector<8x8xf32>
    %185 = vector.shape_cast %184 : vector<8x8xf32> to vector<8x8x1xf32>
    %186 = tpu.reciprocal %185 {approx = true} : vector<8x8x1xf32> -> vector<8x8x1xf32>
    %187 = vector.broadcast %186 : vector<8x8x1xf32> to vector<8x8x8xf32>
    %188 = arith.mulf %183, %187 : vector<8x8x8xf32>
    %189 = arith.truncf %188 : vector<8x8x8xf32> to vector<8x8x8xbf16>
    "tpu.trace_start"() <{level = 10 : i32, message = "gqk,gkd->gqd"}> : () -> ()
    %cst_97 = arith.constant dense<0.000000e+00> : vector<8x8x8xf32>
    %190 = tpu.matmul %189, %175, %cst_97 {dimension_numbers = #tpu.dot_dimension_numbers<[2], [1], [1], [2], [0, 0, 0, 1, 1, 2], [0], [0]>} : vector<8x8x8xbf16>, vector<8x8x8xbf16>, vector<8x8x8xf32> -> vector<8x8x8xf32>
    "tpu.trace_stop"() : () -> ()
    %191 = arith.truncf %190 : vector<8x8x8xf32> to vector<8x8x8xbf16>
    "tpu.trace_start"() <{level = 10 : i32, message = "gsd,gde->gse"}> : () -> ()
    %cst_98 = arith.constant dense<0.000000e+00> : vector<8x8x32xf32>
    %192 = tpu.matmul %191, %138, %cst_98 {dimension_numbers = #tpu.dot_dimension_numbers<[2], [1], [1], [2], [0, 0, 0, 1, 1, 2], [0], [0]>} : vector<8x8x8xbf16>, vector<8x8x32xbf16>, vector<8x8x32xf32> -> vector<8x8x32xf32>
    "tpu.trace_stop"() : () -> ()
    %193 = vector.shape_cast %192 : vector<8x8x32xf32> to vector<4x2x8x32xf32>
    %cst_99 = arith.constant dense<0.000000e+00> : vector<2x8x32xf32>
    %194 = vector.multi_reduction <add>, %193, %cst_99 [0] : vector<4x2x8x32xf32> to vector<2x8x32xf32>
    %195 = vector.shape_cast %194 : vector<2x8x32xf32> to vector<16x32xf32>
    %196 = vector.broadcast %142 : vector<1x32xf32> to vector<16x32xf32>
    %197 = arith.addf %195, %196 : vector<16x32xf32>
    %198 = arith.addf %132, %197 : vector<16x32xf32>
    %cst_100 = arith.constant dense<0.000000e+00> : vector<16xf32>
    %199 = vector.multi_reduction <add>, %198, %cst_100 [1] : vector<16x32xf32> to vector<16xf32>
    %200 = vector.shape_cast %199 : vector<16xf32> to vector<16x1xf32>
    %cst_101 = arith.constant 3.200000e+01 : f32
    %201 = vector.broadcast %cst_101 : f32 to vector<16x1xf32>
    %202 = arith.divf %200, %201 : vector<16x1xf32>
    %203 = vector.broadcast %202 : vector<16x1xf32> to vector<16x32xf32>
    %204 = arith.subf %198, %203 : vector<16x32xf32>
    %205 = arith.mulf %204, %204 : vector<16x32xf32>
    %cst_102 = arith.constant dense<0.000000e+00> : vector<16xf32>
    %206 = vector.multi_reduction <add>, %205, %cst_102 [1] : vector<16x32xf32> to vector<16xf32>
    %207 = vector.shape_cast %206 : vector<16xf32> to vector<16x1xf32>
    %cst_103 = arith.constant 3.200000e+01 : f32
    %208 = vector.broadcast %cst_103 : f32 to vector<16x1xf32>
    %209 = arith.divf %207, %208 : vector<16x1xf32>
    %210 = vector.broadcast %202 : vector<16x1xf32> to vector<16x32xf32>
    %211 = arith.subf %198, %210 : vector<16x32xf32>
    %cst_104 = arith.constant 9.99999974E-6 : f32
    %212 = vector.broadcast %cst_104 : f32 to vector<16x1xf32>
    %213 = arith.addf %209, %212 : vector<16x1xf32>
    %214 = math.rsqrt %213 : vector<16x1xf32>
    %215 = vector.broadcast %214 : vector<16x1xf32> to vector<16x32xf32>
    %216 = arith.mulf %211, %215 : vector<16x32xf32>
    %217 = vector.broadcast %144 : vector<1x32xf32> to vector<16x32xf32>
    %218 = arith.mulf %216, %217 : vector<16x32xf32>
    %219 = vector.broadcast %146 : vector<1x32xf32> to vector<16x32xf32>
    %220 = arith.addf %218, %219 : vector<16x32xf32>
    %221 = arith.truncf %220 : vector<16x32xf32> to vector<16x32xbf16>
    %cst_105 = arith.constant dense<0.000000e+00> : vector<16x64xf32>
    %222 = tpu.matmul %221, %136, %cst_105 {dimension_numbers = #tpu.dot_dimension_numbers<[1], [0], [0], [1], [0, 0, 1, 1], [], []>} : vector<16x32xbf16>, vector<32x64xbf16>, vector<16x64xf32> -> vector<16x64xf32>
    %223 = vector.broadcast %154 : vector<1x64xf32> to vector<16x64xf32>
    %224 = arith.addf %222, %223 : vector<16x64xf32>
    %cst_106 = arith.constant 0.000000e+00 : f32
    %225 = vector.broadcast %cst_106 : f32 to vector<16x64xf32>
    %226 = arith.maximumf %224, %225 : vector<16x64xf32>
    %227 = arith.truncf %226 : vector<16x64xf32> to vector<16x64xbf16>
    %cst_107 = arith.constant dense<0.000000e+00> : vector<16x32xf32>
    %228 = tpu.matmul %227, %140, %cst_107 {dimension_numbers = #tpu.dot_dimension_numbers<[1], [0], [0], [1], [0, 0, 1, 1], [], []>} : vector<16x64xbf16>, vector<64x32xbf16>, vector<16x32xf32> -> vector<16x32xf32>
    %229 = vector.broadcast %148 : vector<1x32xf32> to vector<16x32xf32>
    %230 = arith.addf %228, %229 : vector<16x32xf32>
    %231 = arith.addf %220, %230 : vector<16x32xf32>
    %cst_108 = arith.constant dense<0.000000e+00> : vector<16xf32>
    %232 = vector.multi_reduction <add>, %231, %cst_108 [1] : vector<16x32xf32> to vector<16xf32>
    %233 = vector.shape_cast %232 : vector<16xf32> to vector<16x1xf32>
    %cst_109 = arith.constant 3.200000e+01 : f32
    %234 = vector.broadcast %cst_109 : f32 to vector<16x1xf32>
    %235 = arith.divf %233, %234 : vector<16x1xf32>
    %236 = vector.broadcast %235 : vector<16x1xf32> to vector<16x32xf32>
    %237 = arith.subf %231, %236 : vector<16x32xf32>
    %238 = arith.mulf %237, %237 : vector<16x32xf32>
    %cst_110 = arith.constant dense<0.000000e+00> : vector<16xf32>
    %239 = vector.multi_reduction <add>, %238, %cst_110 [1] : vector<16x32xf32> to vector<16xf32>
    %240 = vector.shape_cast %239 : vector<16xf32> to vector<16x1xf32>
    %cst_111 = arith.constant 3.200000e+01 : f32
    %241 = vector.broadcast %cst_111 : f32 to vector<16x1xf32>
    %242 = arith.divf %240, %241 : vector<16x1xf32>
    %243 = vector.broadcast %235 : vector<16x1xf32> to vector<16x32xf32>
    %244 = arith.subf %231, %243 : vector<16x32xf32>
    %cst_112 = arith.constant 9.99999974E-6 : f32
    %245 = vector.broadcast %cst_112 : f32 to vector<16x1xf32>
    %246 = arith.addf %242, %245 : vector<16x1xf32>
    %247 = math.rsqrt %246 : vector<16x1xf32>
    %248 = vector.broadcast %247 : vector<16x1xf32> to vector<16x32xf32>
    %249 = arith.mulf %244, %248 : vector<16x32xf32>
    %250 = vector.broadcast %150 : vector<1x32xf32> to vector<16x32xf32>
    %251 = arith.mulf %249, %250 : vector<16x32xf32>
    %252 = vector.broadcast %152 : vector<1x32xf32> to vector<16x32xf32>
    %253 = arith.addf %251, %252 : vector<16x32xf32>
    %254 = vector.shape_cast %253 : vector<16x32xf32> to vector<2x8x32xf32>
    %255 = tpu.transpose %254, [1, 0, 2] : vector<2x8x32xf32> -> vector<8x2x32xf32>
    %c0_113 = arith.constant 0 : index
    %c0_114 = arith.constant 0 : index
    %c0_115 = arith.constant 0 : index
    %256 = vector.load %arg9[%c0_113, %c0_114, %c0_115] : memref<8x2x32xf32, #tpu.memory_space<vmem>>, vector<8x2x32xf32>
    tpu.vector_store %arg9[%c0_113, %c0_114, %c0_115], %255 {strides = array<i32>} : memref<8x2x32xf32, #tpu.memory_space<vmem>>, vector<8x2x32xf32>,
    return
  }
}

</mosaic_0001>

<llo_original>
// kernel: tpu_custom_call.1
$region0: #{tpu_custom_call.1}
  #allocation0 [shape = 'u32[]', space=smem, size = 0x4, offset = 0x4, fixed_abs, tag = 'smem constant byte address 0x4 - core index']
  #allocation1 [shape = 'u32[72,128]{1,0:T(1,128)}', space=vmem, size = 0x9000, scoped, tag = 'internal scratch']
  %s0 = inlined_call_operand.vmem [shape: f32[8,2,32], index: 0, kind: input, shape index: {}]
  %s1 = inlined_call_operand.hbm [shape: f32[8,2,32], index: 1, kind: input, shape index: {}]
  %s2 = inlined_call_operand.vmem [shape: bf16[2,32,192], index: 2, kind: input, shape index: {}]
  %s3 = inlined_call_operand.hbm [shape: bf16[2,8,8,32], index: 3, kind: input, shape index: {}]
  %s4 = inlined_call_operand.vmem [shape: bf16[2,64,32], index: 4, kind: input, shape index: {}]
  %s5 = inlined_call_operand.vmem [shape: bf16[32,256], index: 5, kind: input, shape index: {}]
  %s6 = inlined_call_operand.vmem [shape: f32[1,256], index: 6, kind: input, shape index: {}]
  %s7 = inlined_call_operand.vmem [shape: f32[2,6,32], index: 7, kind: input, shape index: {}]
  %s8 = inlined_call_operand.vmem [shape: f32[2,1,64], index: 8, kind: input, shape index: {}]
  %s9 = inlined_call_operand.hbm [shape: f32[8,2,32], index: 9, kind: output, shape index: {}]
  %s10 = sld [smem:[#allocation0]]
  $region54: #{tpu_custom_call.1} parent=0
    _
  %s12 = ssub.s32 1, %s10
  %s13 = scalar_select 0, %s12, %s10
  $region1: #{tpu_custom_call.1} parent=0
    #allocation2 [shape = 'u8[8192]{0}', space=vmem, size = 0x2000, scoped, tag = 'input window, operand 1, single buffered']
    #allocation3 [shape = 's32[1]{0}', space=sflag, size = 0x4, scoped, tag = 'scoped memory for tpu_custom_call.1']
    #allocation4 [shape = 's32[1]{0}', space=sflag, size = 0x4, scoped, tag = 'scoped memory for tpu_custom_call.1']
    #allocation5 [shape = 'u8[32768]{0}', space=vmem, size = 0x8000, scoped, tag = 'input window, operand 3, single buffered']
    #allocation6 [shape = 's32[1]{0}', space=sflag, size = 0x4, scoped, tag = 'scoped memory for tpu_custom_call.1']
    #allocation7 [shape = 'u8[8192]{0}', space=vmem, size = 0x2000, scoped, tag = 'output window, operand 0, single buffered']
    %14 = vsyncpa [#allocation3], 0
    %15 = vsyncpa [#allocation6], 0
    %16 = vsyncpa [#allocation4], 0
    // Predicated region
    $region2: #{tpu_custom_call.1} parent=1 // pred_check
      _
    $region3: #{tpu_custom_call.1} parent=1 // pred_check_branch
      %18 = sbr.rel (0) target = $region5
    $region4: #{tpu_custom_call.1} parent=1 // pred_region
      _
    $region5: #{tpu_custom_call.1} parent=1 // pred_fallthru
      _
    // Predicated region
    $region6: #{tpu_custom_call.1} parent=1 // pred_check
      _
    $region7: #{tpu_custom_call.1} parent=1 // pred_check_branch
      %20 = sbr.rel (0) target = $region9
    $region8: #{tpu_custom_call.1} parent=1 // pred_region
      %22 = vsyncadd [#allocation3], 0
      %s23 = sshll.u32 %s1, 4
      %s24 = int_to_ptr.hbm [resolvable:$true] %s23
      %s25 = sshll.u32 [#allocation2], 4
      %s26 = int_to_ptr.vmem [resolvable:$true] %s25
      %31 = dma.hbm_to_vmem [thread:$0]  %s24, 256, %s26, [#allocation3], 32, 32, 2
    $region9: #{tpu_custom_call.1} parent=1 // pred_fallthru
      _
    // Predicated region
    $region10: #{tpu_custom_call.1} parent=1 // pred_check
      _
    $region11: #{tpu_custom_call.1} parent=1 // pred_check_branch
      %33 = sbr.rel (0) target = $region13
    $region12: #{tpu_custom_call.1} parent=1 // pred_region
      _
    $region13: #{tpu_custom_call.1} parent=1 // pred_fallthru
      _
    // Predicated region
    $region14: #{tpu_custom_call.1} parent=1 // pred_check
      _
    $region15: #{tpu_custom_call.1} parent=1 // pred_check_branch
      %35 = sbr.rel (0) target = $region17
    $region16: #{tpu_custom_call.1} parent=1 // pred_region
      %37 = vsyncadd [#allocation6], 0
      %s38 = sshll.u32 %s3, 4
      %s39 = int_to_ptr.hbm [resolvable:$true] %s38
      %s40 = sshll.u32 [#allocation5], 4
      %s41 = int_to_ptr.vmem [resolvable:$true] %s40
      %46 = dma.hbm_to_vmem [thread:$0]  %s39, 1024, %s41, [#allocation6], 64, 64, 4
    $region17: #{tpu_custom_call.1} parent=1 // pred_fallthru
      _
    // Predicated region
    $region18: #{tpu_custom_call.1} parent=1 // pred_check
      _
    $region19: #{tpu_custom_call.1} parent=1 // pred_check_branch
      %48 = sbr.rel (0) target = $region21
    $region20: #{tpu_custom_call.1} parent=1 // pred_region
      _
    $region21: #{tpu_custom_call.1} parent=1 // pred_fallthru
      _
    // Predicated region
    $region22: #{tpu_custom_call.1} parent=1 // pred_check
      _
    $region23: #{tpu_custom_call.1} parent=1 // pred_check_branch
      %50 = sbr.rel (0) target = $region25
    $region24: #{tpu_custom_call.1} parent=1 // pred_region
      _
    $region25: #{tpu_custom_call.1} parent=1 // pred_fallthru
      _
    // Predicated region
    $region26: #{tpu_custom_call.1} parent=1 // pred_check
      _
    $region27: #{tpu_custom_call.1} parent=1 // pred_check_branch
      %52 = sbr.rel (0) target = $region29
    $region28: #{tpu_custom_call.1} parent=1 // pred_region
      _
    $region29: #{tpu_custom_call.1} parent=1 // pred_fallthru
      _
    // Predicated region
    $region30: #{tpu_custom_call.1} parent=1 // pred_check
      _
    $region31: #{tpu_custom_call.1} parent=1 // pred_check_branch
      %54 = sbr.rel (0) target = $region33
    $region32: #{tpu_custom_call.1} parent=1 // pred_region
      _
    $region33: #{tpu_custom_call.1} parent=1 // pred_fallthru
      _
    // Predicated region
    $region34: #{tpu_custom_call.1} parent=1 // pred_check
      _
    $region35: #{tpu_custom_call.1} parent=1 // pred_check_branch
      %56 = sbr.rel (0) target = $region37
    $region36: #{tpu_custom_call.1} parent=1 // pred_region
      _
    $region37: #{tpu_custom_call.1} parent=1 // pred_fallthru
      _
    // Predicated region
    $region38: #{tpu_custom_call.1} parent=1 // pred_check
      _
    $region39: #{tpu_custom_call.1} parent=1 // pred_check_branch
      %58 = sbr.rel (0) target = $region41
    $region40: #{tpu_custom_call.1} parent=1 // pred_region
      %60 = dma.done [#allocation3], 256
    $region41: #{tpu_custom_call.1} parent=1 // pred_fallthru
      _
    // Predicated region
    $region42: #{tpu_custom_call.1} parent=1 // pred_check
      _
    $region43: #{tpu_custom_call.1} parent=1 // pred_check_branch
      %62 = sbr.rel (0) target = $region45
    $region44: #{tpu_custom_call.1} parent=1 // pred_region
      %64 = dma.done [#allocation6], 1024
    $region45: #{tpu_custom_call.1} parent=1 // pred_fallthru
      _
    %v66 = vld [vmem:[%s0] sm:$0x3]
    %v67 = vld [vmem:[%s0 + $0x2] sm:$0x3]
    %v68 = vld [vmem:[%s0 + $0x4] sm:$0x3]
    %v69 = vld [vmem:[%s0 + $0x6] sm:$0x3]
    %v70 = vld [vmem:[%s0 + $0x8] sm:$0x3]
    %v71 = vld [vmem:[%s0 + $0xa] sm:$0x3]
    %v72 = vld [vmem:[%s0 + $0xc] sm:$0x3]
    %v73 = vld [vmem:[%s0 + $0xe] sm:$0x3]
    %v74 = vrot.slane %v68, 4
    %vm75 = vcmask 1047556
    %v76 = vsel %vm75, %v74, %v66
    %v78 = vunpack.c.l.s4 1983009808
    %v79 = vunpack.c.0.s8 %v78
    %v80 = vperm.slane %v76, %v79
    %v81 = vrot.slane %v69, 4
    %v82 = vsel %vm75, %v81, %v67
    %v84 = vunpack.c.l.s4 1983009808
    %v85 = vunpack.c.0.s8 %v84
    %v86 = vperm.slane %v82, %v85
    %v87 = vrot.slane %v72, 4
    %v88 = vsel %vm75, %v87, %v70
    %v90 = vunpack.c.l.s4 1983009808
    %v91 = vunpack.c.0.s8 %v90
    %v92 = vperm.slane %v88, %v91
    %v93 = vrot.slane %v73, 4
    %v94 = vsel %vm75, %v93, %v71
    %v96 = vunpack.c.l.s4 1983009808
    %v97 = vunpack.c.0.s8 %v96
    %v98 = vperm.slane %v94, %v97
    %v99 = vrot.slane %v86, 4
    %v100 = vsel %vm75, %v99, %v80
    %v102 = vunpack.c.l.s4 1934713408
    %v103 = vunpack.c.0.s8 %v102
    %v104 = vperm.slane %v100, %v103
    %v105 = vrot.slane %v98, 4
    %v106 = vsel %vm75, %v105, %v92
    %v108 = vunpack.c.l.s4 1934713408
    %v109 = vunpack.c.0.s8 %v108
    %v110 = vperm.slane %v106, %v109
    %v111 = vrot.slane %v110, 4
    %v112 = vsel %vm75, %v111, %v104
    %v113 = vrot.slane %v104, 4
    %v114 = vsel %vm75, %v110, %v113
    %v115 = vld [vmem:[#allocation2] sm:$0x3]
    %v116 = vld [vmem:[#allocation2 + $0x2] sm:$0x3]
    %v117 = vld [vmem:[#allocation2 + $0x4] sm:$0x3]
    %v118 = vld [vmem:[#allocation2 + $0x6] sm:$0x3]
    %v119 = vld [vmem:[#allocation2 + $0x8] sm:$0x3]
    %v120 = vld [vmem:[#allocation2 + $0xa] sm:$0x3]
    %v121 = vld [vmem:[#allocation2 + $0xc] sm:$0x3]
    %v122 = vld [vmem:[#allocation2 + $0xe] sm:$0x3]
    %v123 = vrot.slane %v117, 4
    %v124 = vsel %vm75, %v123, %v115
    %v126 = vunpack.c.l.s4 1983009808
    %v127 = vunpack.c.0.s8 %v126
    %v128 = vperm.slane %v124, %v127
    %v129 = vrot.slane %v118, 4
    %v130 = vsel %vm75, %v129, %v116
    %v132 = vunpack.c.l.s4 1983009808
    %v133 = vunpack.c.0.s8 %v132
    %v134 = vperm.slane %v130, %v133
    %v135 = vrot.slane %v121, 4
    %v136 = vsel %vm75, %v135, %v119
    %v138 = vunpack.c.l.s4 1983009808
    %v139 = vunpack.c.0.s8 %v138
    %v140 = vperm.slane %v136, %v139
    %v141 = vrot.slane %v122, 4
    %v142 = vsel %vm75, %v141, %v120
    %v144 = vunpack.c.l.s4 1983009808
    %v145 = vunpack.c.0.s8 %v144
    %v146 = vperm.slane %v142, %v145
    %v147 = vrot.slane %v134, 4
    %v148 = vsel %vm75, %v147, %v128
    %v150 = vunpack.c.l.s4 1934713408
    %v151 = vunpack.c.0.s8 %v150
    %v152 = vperm.slane %v148, %v151
    %v153 = vrot.slane %v146, 4
    %v154 = vsel %vm75, %v153, %v140
    %v156 = vunpack.c.l.s4 1934713408
    %v157 = vunpack.c.0.s8 %v156
    %v158 = vperm.slane %v154, %v157
    %v159 = vrot.slane %v158, 4
    %v160 = vsel %vm75, %v159, %v152
    %v161 = vrot.slane %v152, 4
    %v162 = vsel %vm75, %v158, %v161
    %v163 = vpack.c.bf16 %v162, %v160
    %v164 = vld [vmem:[%s5] sm:$0xff]
    %v165 = vld [vmem:[%s5 + $0x8] sm:$0xff]
    %v166 = vld [vmem:[%s5 + $0x10] sm:$0xff]
    %v167 = vld [vmem:[%s5 + $0x18] sm:$0xff]
    %v168 = vld [vmem:[%s6] sm:$0x3]
    %v170 = vperm.slane %v168, 0
    %v171 = vperm.slane %v168, 1
    %v178 = vunpack.c.l.b16 %v164
    %v179 = vunpack.c.h.b16 %v164
    %v180 = vunpack.c.l.b16 %v165
    %v181 = vunpack.c.h.b16 %v165
    %v182 = vunpack.c.l.b16 %v166
    %v183 = vunpack.c.h.b16 %v166
    %v184 = vunpack.c.l.b16 %v167
    %v185 = vunpack.c.h.b16 %v167
    %v186 = vpack.c.b16 %v180, %v178
    %v187 = vpack.c.b16 %v181, %v179
    %v188 = vpack.c.b16 %v184, %v182
    %v189 = vpack.c.b16 %v185, %v183
    %vm194 = vcmask 261120
    %v196 = vsel %vm194, %v163, 0
    %198 = vmatpush.bf16.msra.mxu0 0
    %199 = vmatpush.bf16.msra.mxu0 0
    %200 = vmatpush.bf16.msra.mxu0 0
    %201 = vmatpush.bf16.msra.mxu0 0
    %202 = vmatpush.bf16.msra.mxu0 0
    %203 = vmatpush.bf16.msra.mxu0 0
    %204 = vmatpush.bf16.msra.mxu0 %v188
    %205 = vmatpush.bf16.msra.mxu0 %v186
    %206 = vmatmul.bf16.gmra.mxu0 %v196
    %v207 = vpop.f32.mrf.mxu0
    %v208 = vadd.f32 %v170, %v207
    %v209 = vpop.f32.mrf.mxu0
    %v210 = vadd.f32 %v170, %v209
    %211 = vdwg.mxu0
    %212 = vmatpush.bf16.msra.mxu0 0
    %213 = vmatpush.bf16.msra.mxu0 0
    %214 = vmatpush.bf16.msra.mxu0 0
    %215 = vmatpush.bf16.msra.mxu0 0
    %216 = vmatpush.bf16.msra.mxu0 0
    %217 = vmatpush.bf16.msra.mxu0 0
    %218 = vmatpush.bf16.msra.mxu0 %v189
    %219 = vmatpush.bf16.msra.mxu0 %v187
    %220 = vmatmul.bf16.gmra.mxu0 %v196
    %v221 = vpop.f32.mrf.mxu0
    %v222 = vadd.f32 %v171, %v221
    %v223 = vpop.f32.mrf.mxu0
    %v224 = vadd.f32 %v171, %v223
    %225 = vdwg.mxu0
    %v226 = vld [vmem:[%s2] sm:$0xf]
    %v227 = vld [vmem:[%s2 + $0x8] sm:$0xf]
    %v228 = vld [vmem:[%s2 + $0x10] sm:$0xf]
    %v229 = vld [vmem:[%s2 + $0x18] sm:$0xf]
    %v230 = vld [vmem:[%s2 + $0x4] sm:$0xf]
    %v231 = vld [vmem:[%s2 + $0xc] sm:$0xf]
    %v232 = vld [vmem:[%s2 + $0x14] sm:$0xf]
    %v233 = vld [vmem:[%s2 + $0x1c] sm:$0xf]
    %v234 = vld [vmem:[#allocation5] sm:$0xf]
    %v235 = vld [vmem:[#allocation5 + $0x4] sm:$0xf]
    %v236 = vld [vmem:[#allocation5 + $0x8] sm:$0xf]
    %v237 = vld [vmem:[#allocation5 + $0xc] sm:$0xf]
    %v238 = vld [vmem:[#allocation5 + $0x10] sm:$0xf]
    %v239 = vld [vmem:[#allocation5 + $0x14] sm:$0xf]
    %v240 = vld [vmem:[#allocation5 + $0x18] sm:$0xf]
    %v241 = vld [vmem:[#allocation5 + $0x1c] sm:$0xf]
    %v242 = vld [vmem:[%s4] sm:$0xf]
    %v243 = vld [vmem:[%s4 + $0x4] sm:$0xf]
    %v244 = vld [vmem:[%s4 + $0x8] sm:$0xf]
    %v245 = vld [vmem:[%s4 + $0xc] sm:$0xf]
    %v246 = vld [vmem:[%s4 + $0x10] sm:$0xf]
    %v247 = vld [vmem:[%s4 + $0x14] sm:$0xf]
    %v248 = vld [vmem:[%s4 + $0x18] sm:$0xf]
    %v249 = vld [vmem:[%s4 + $0x1c] sm:$0xf]
    %v250 = vld [vmem:[%s7] sm:$0x1]
    %v251 = vld [vmem:[%s7 + $0x1] sm:$0x1]
    %v252 = vld [vmem:[%s7 + $0x2] sm:$0x1]
    %v253 = vld [vmem:[%s7 + $0x3] sm:$0x1]
    %v254 = vld [vmem:[%s7 + $0x4] sm:$0x1]
    %v255 = vld [vmem:[%s7 + $0x5] sm:$0x1]
    %v256 = vld [vmem:[%s8] sm:$0x1]
    %v257 = vpack.c.bf16 %v114, %v112
    %v262 = vunpack.c.l.b16 %v226
    %v263 = vunpack.c.l.b16 %v227
    %v264 = vunpack.c.l.b16 %v228
    %v265 = vunpack.c.l.b16 %v229
    %v266 = vpack.c.b16 %v263, %v262
    %v267 = vpack.c.b16 %v265, %v264
    %v271 = vsel %vm194, %v257, 0
    %273 = vmatpush.bf16.msra.mxu0 0
    %274 = vmatpush.bf16.msra.mxu0 0
    %275 = vmatpush.bf16.msra.mxu0 0
    %276 = vmatpush.bf16.msra.mxu0 0
    %277 = vmatpush.bf16.msra.mxu0 0
    %278 = vmatpush.bf16.msra.mxu0 0
    %279 = vmatpush.bf16.msra.mxu0 %v267
    %280 = vmatpush.bf16.msra.mxu0 %v266
    %281 = vmatmul.bf16.gmra.mxu0 %v271
    %v282 = vpop.f32.mrf.mxu0
    %v283 = vadd.f32 %v208, %v282
    %v284 = vpop.f32.mrf.mxu0
    %v285 = vadd.f32 %v210, %v284
    %286 = vdwg.mxu0
    %v287 = vpack.c.bf16 %v283, %v283
    %v288 = vpack.c.bf16 %v285, %v285
    %291 = vrot.lane.b32.xlu0 %v287, 120
    %v292 = vpop.permute.xlu0 %291
    %293 = vrot.lane.b32.xlu0 %v288, 120
    %v294 = vpop.permute.xlu0 %293
    %295 = vrot.lane.b32.xlu0 %v287, 112
    %v296 = vpop.permute.xlu0 %295
    %297 = vrot.lane.b32.xlu0 %v288, 112
    %v298 = vpop.permute.xlu0 %297
    %299 = vrot.lane.b32.xlu0 %v287, 104
    %v300 = vpop.permute.xlu0 %299
    %301 = vrot.lane.b32.xlu0 %v288, 104
    %v302 = vpop.permute.xlu0 %301
    %v303 = vunpack.c.l.b16 %v287
    %v304 = vpack.c.b16 %v303, %v303
    %305 = vrot.lane.b32.xlu0 %v304, 96
    %v306 = vpop.permute.xlu0 %305
    %vm307 = vcmask 64512
    %v309 = vsel %vm307, %v287, 0
    %v312 = vsel %vm307, %v306, 0
    %314 = vmatpush.bf16.xpose.msra.mxu0 0
    %315 = vmatpush.bf16.xpose.msra.mxu0 0
    %316 = vmatpush.bf16.xpose.msra.mxu0 0
    %317 = vmatpush.bf16.xpose.msra.mxu0 0
    %318 = vmatpush.bf16.xpose.msra.mxu0 0
    %319 = vmatpush.bf16.xpose.msra.mxu0 0
    %320 = vmatpush.bf16.xpose.msra.mxu0 0
    %321 = vmatpush.bf16.xpose.msra.mxu0 %v312
    %322 = vmatmul.bf16.gmra.mxu0 %v309
    %v323 = vpop.f32.mrf.mxu0
    %v324 = vadd.f32 0.0, %v323
    %v325 = vpop.f32.mrf.mxu0
    %326 = vdwg.mxu0
    %v327 = vunpack.c.l.b16 %v288
    %v328 = vpack.c.b16 %v327, %v327
    %329 = vrot.lane.b32.xlu0 %v328, 96
    %v330 = vpop.permute.xlu0 %329
    %v332 = vsel %vm307, %v288, 0
    %v335 = vsel %vm307, %v330, 0
    %337 = vmatpush.bf16.xpose.msra.mxu0 0
    %338 = vmatpush.bf16.xpose.msra.mxu0 0
    %339 = vmatpush.bf16.xpose.msra.mxu0 0
    %340 = vmatpush.bf16.xpose.msra.mxu0 0
    %341 = vmatpush.bf16.xpose.msra.mxu0 0
    %342 = vmatpush.bf16.xpose.msra.mxu0 0
    %343 = vmatpush.bf16.xpose.msra.mxu0 0
    %344 = vmatpush.bf16.xpose.msra.mxu0 %v335
    %345 = vmatmul.bf16.gmra.mxu0 %v332
    %v346 = vpop.f32.mrf.mxu0
    %v347 = vadd.f32 0.0, %v346
    %v348 = vpop.f32.mrf.mxu0
    %349 = vdwg.mxu0
    %v350 = vunpack.c.l.b16 %v292
    %v351 = vpack.c.b16 %v350, %v350
    %352 = vrot.lane.b32.xlu0 %v351, 96
    %v353 = vpop.permute.xlu0 %352
    %v355 = vsel %vm307, %v292, 0
    %v358 = vsel %vm307, %v353, 0
    %360 = vmatpush.bf16.xpose.msra.mxu0 0
    %361 = vmatpush.bf16.xpose.msra.mxu0 0
    %362 = vmatpush.bf16.xpose.msra.mxu0 0
    %363 = vmatpush.bf16.xpose.msra.mxu0 0
    %364 = vmatpush.bf16.xpose.msra.mxu0 0
    %365 = vmatpush.bf16.xpose.msra.mxu0 0
    %366 = vmatpush.bf16.xpose.msra.mxu0 0
    %367 = vmatpush.bf16.xpose.msra.mxu0 %v358
    %368 = vmatmul.bf16.gmra.mxu0 %v355
    %v369 = vpop.f32.mrf.mxu0
    %v370 = vadd.f32 0.0, %v369
    %v371 = vpop.f32.mrf.mxu0
    %372 = vdwg.mxu0
    %v373 = vunpack.c.l.b16 %v294
    %v374 = vpack.c.b16 %v373, %v373
    %375 = vrot.lane.b32.xlu0 %v374, 96
    %v376 = vpop.permute.xlu0 %375
    %v378 = vsel %vm307, %v294, 0
    %v381 = vsel %vm307, %v376, 0
    %383 = vmatpush.bf16.xpose.msra.mxu0 0
    %384 = vmatpush.bf16.xpose.msra.mxu0 0
    %385 = vmatpush.bf16.xpose.msra.mxu0 0
    %386 = vmatpush.bf16.xpose.msra.mxu0 0
    %387 = vmatpush.bf16.xpose.msra.mxu0 0
    %388 = vmatpush.bf16.xpose.msra.mxu0 0
    %389 = vmatpush.bf16.xpose.msra.mxu0 0
    %390 = vmatpush.bf16.xpose.msra.mxu0 %v381
    %391 = vmatmul.bf16.gmra.mxu0 %v378
    %v392 = vpop.f32.mrf.mxu0
    %v393 = vadd.f32 0.0, %v392
    %v394 = vpop.f32.mrf.mxu0
    %395 = vdwg.mxu0
    %v396 = vunpack.c.l.b16 %v296
    %v397 = vpack.c.b16 %v396, %v396
    %398 = vrot.lane.b32.xlu0 %v397, 96
    %v399 = vpop.permute.xlu0 %398
    %v401 = vsel %vm307, %v296, 0
    %v404 = vsel %vm307, %v399, 0
    %406 = vmatpush.bf16.xpose.msra.mxu0 0
    %407 = vmatpush.bf16.xpose.msra.mxu0 0
    %408 = vmatpush.bf16.xpose.msra.mxu0 0
    %409 = vmatpush.bf16.xpose.msra.mxu0 0
    %410 = vmatpush.bf16.xpose.msra.mxu0 0
    %411 = vmatpush.bf16.xpose.msra.mxu0 0
    %412 = vmatpush.bf16.xpose.msra.mxu0 0
    %413 = vmatpush.bf16.xpose.msra.mxu0 %v404
    %414 = vmatmul.bf16.gmra.mxu0 %v401
    %v415 = vpop.f32.mrf.mxu0
    %v416 = vadd.f32 0.0, %v415
    %v417 = vpop.f32.mrf.mxu0
    %418 = vdwg.mxu0
    %v419 = vunpack.c.l.b16 %v298
    %v420 = vpack.c.b16 %v419, %v419
    %421 = vrot.lane.b32.xlu0 %v420, 96
    %v422 = vpop.permute.xlu0 %421
    %v424 = vsel %vm307, %v298, 0
    %v427 = vsel %vm307, %v422, 0
    %429 = vmatpush.bf16.xpose.msra.mxu0 0
    %430 = vmatpush.bf16.xpose.msra.mxu0 0
    %431 = vmatpush.bf16.xpose.msra.mxu0 0
    %432 = vmatpush.bf16.xpose.msra.mxu0 0
    %433 = vmatpush.bf16.xpose.msra.mxu0 0
    %434 = vmatpush.bf16.xpose.msra.mxu0 0
    %435 = vmatpush.bf16.xpose.msra.mxu0 0
    %436 = vmatpush.bf16.xpose.msra.mxu0 %v427
    %437 = vmatmul.bf16.gmra.mxu0 %v424
    %v438 = vpop.f32.mrf.mxu0
    %v439 = vadd.f32 0.0, %v438
    %v440 = vpop.f32.mrf.mxu0
    %441 = vdwg.mxu0
    %v442 = vunpack.c.l.b16 %v300
    %v443 = vpack.c.b16 %v442, %v442
    %444 = vrot.lane.b32.xlu0 %v443, 96
    %v445 = vpop.permute.xlu0 %444
    %v447 = vsel %vm307, %v300, 0
    %v450 = vsel %vm307, %v445, 0
    %452 = vmatpush.bf16.xpose.msra.mxu0 0
    %453 = vmatpush.bf16.xpose.msra.mxu0 0
    %454 = vmatpush.bf16.xpose.msra.mxu0 0
    %455 = vmatpush.bf16.xpose.msra.mxu0 0
    %456 = vmatpush.bf16.xpose.msra.mxu0 0
    %457 = vmatpush.bf16.xpose.msra.mxu0 0
    %458 = vmatpush.bf16.xpose.msra.mxu0 0
    %459 = vmatpush.bf16.xpose.msra.mxu0 %v450
    %460 = vmatmul.bf16.gmra.mxu0 %v447
    %v461 = vpop.f32.mrf.mxu0
    %v462 = vadd.f32 0.0, %v461
    %v463 = vpop.f32.mrf.mxu0
    %464 = vdwg.mxu0
    %v465 = vunpack.c.l.b16 %v302
    %v466 = vpack.c.b16 %v465, %v465
    %467 = vrot.lane.b32.xlu0 %v466, 96
    %v468 = vpop.permute.xlu0 %467
    %v470 = vsel %vm307, %v302, 0
    %v473 = vsel %vm307, %v468, 0
    %475 = vmatpush.bf16.xpose.msra.mxu0 0
    %476 = vmatpush.bf16.xpose.msra.mxu0 0
    %477 = vmatpush.bf16.xpose.msra.mxu0 0
    %478 = vmatpush.bf16.xpose.msra.mxu0 0
    %479 = vmatpush.bf16.xpose.msra.mxu0 0
    %480 = vmatpush.bf16.xpose.msra.mxu0 0
    %481 = vmatpush.bf16.xpose.msra.mxu0 0
    %482 = vmatpush.bf16.xpose.msra.mxu0 %v473
    %483 = vmatmul.bf16.gmra.mxu0 %v470
    %v484 = vpop.f32.mrf.mxu0
    %v485 = vadd.f32 0.0, %v484
    %v486 = vpop.f32.mrf.mxu0
    %487 = vdwg.mxu0
    %v488 = vmul.f32 %v324, 0.35355338
    %v489 = vmul.f32 %v347, 0.35355338
    %v490 = vmul.f32 %v370, 0.35355338
    %v491 = vmul.f32 %v393, 0.35355338
    %v492 = vmul.f32 %v416, 0.35355338
    %v493 = vmul.f32 %v439, 0.35355338
    %v494 = vmul.f32 %v462, 0.35355338
    %v495 = vmul.f32 %v485, 0.35355338
    %v496 = vsel %vm307, %v488, -inf
    %497 = vmax.xlane.f32.xlu0 %v496
    %v498 = vpop.xlane.xlu0 %497
    %v499 = vsel %vm307, %v489, -inf
    %500 = vmax.xlane.f32.xlu0 %v499
    %v501 = vpop.xlane.xlu0 %500
    %v502 = vsel %vm307, %v490, -inf
    %503 = vmax.xlane.f32.xlu0 %v502
    %v504 = vpop.xlane.xlu0 %503
    %v505 = vsel %vm307, %v491, -inf
    %506 = vmax.xlane.f32.xlu0 %v505
    %v507 = vpop.xlane.xlu0 %506
    %v508 = vsel %vm307, %v492, -inf
    %509 = vmax.xlane.f32.xlu0 %v508
    %v510 = vpop.xlane.xlu0 %509
    %v511 = vsel %vm307, %v493, -inf
    %512 = vmax.xlane.f32.xlu0 %v511
    %v513 = vpop.xlane.xlu0 %512
    %v514 = vsel %vm307, %v494, -inf
    %515 = vmax.xlane.f32.xlu0 %v514
    %v516 = vpop.xlane.xlu0 %515
    %v517 = vsel %vm307, %v495, -inf
    %518 = vmax.xlane.f32.xlu0 %v517
    %v519 = vpop.xlane.xlu0 %518
    %v520 = vsub.f32 %v488, %v498
    %v521 = vsub.f32 %v489, %v501
    %v522 = vsub.f32 %v490, %v504
    %v523 = vsub.f32 %v491, %v507
    %v524 = vsub.f32 %v492, %v510
    %v525 = vsub.f32 %v493, %v513
    %v526 = vsub.f32 %v494, %v516
    %v527 = vsub.f32 %v495, %v519
    %v528 = vmul.f32 %v520, 1.442695
    %v529 = vpow.pop %v528
    %v530 = vmul.f32 %v521, 1.442695
    %v531 = vpow.pop %v530
    %v532 = vmul.f32 %v522, 1.442695
    %v533 = vpow.pop %v532
    %v534 = vmul.f32 %v523, 1.442695
    %v535 = vpow.pop %v534
    %v536 = vmul.f32 %v524, 1.442695
    %v537 = vpow.pop %v536
    %v538 = vmul.f32 %v525, 1.442695
    %v539 = vpow.pop %v538
    %v540 = vmul.f32 %v526, 1.442695
    %v541 = vpow.pop %v540
    %v542 = vmul.f32 %v527, 1.442695
    %v543 = vpow.pop %v542
    %v544 = vsel %vm307, %v529, 0.0
    %545 = vadd.xlane.f32.xlu0 %v544
    %v546 = vpop.xlane.xlu0 %545
    %v547 = vsel %vm307, %v531, 0.0
    %548 = vadd.xlane.f32.xlu0 %v547
    %v549 = vpop.xlane.xlu0 %548
    %v550 = vsel %vm307, %v533, 0.0
    %551 = vadd.xlane.f32.xlu0 %v550
    %v552 = vpop.xlane.xlu0 %551
    %v553 = vsel %vm307, %v535, 0.0
    %554 = vadd.xlane.f32.xlu0 %v553
    %v555 = vpop.xlane.xlu0 %554
    %v556 = vsel %vm307, %v537, 0.0
    %557 = vadd.xlane.f32.xlu0 %v556
    %v558 = vpop.xlane.xlu0 %557
    %v559 = vsel %vm307, %v539, 0.0
    %560 = vadd.xlane.f32.xlu0 %v559
    %v561 = vpop.xlane.xlu0 %560
    %v562 = vsel %vm307, %v541, 0.0
    %563 = vadd.xlane.f32.xlu0 %v562
    %v564 = vpop.xlane.xlu0 %563
    %v565 = vsel %vm307, %v543, 0.0
    %566 = vadd.xlane.f32.xlu0 %v565
    %v567 = vpop.xlane.xlu0 %566
    %v568 = vrcp.pop %v546
    %v569 = vrcp.pop %v549
    %v570 = vrcp.pop %v552
    %v571 = vrcp.pop %v555
    %v572 = vrcp.pop %v558
    %v573 = vrcp.pop %v561
    %v574 = vrcp.pop %v564
    %v575 = vrcp.pop %v567
    %v576 = vmul.f32 %v529, %v568
    %v577 = vmul.f32 %v531, %v569
    %v578 = vmul.f32 %v533, %v570
    %v579 = vmul.f32 %v535, %v571
    %v580 = vmul.f32 %v537, %v572
    %v581 = vmul.f32 %v539, %v573
    %v582 = vmul.f32 %v541, %v574
    %v583 = vmul.f32 %v543, %v575
    %v584 = vpack.c.bf16 %v576, %v576
    %v585 = vpack.c.bf16 %v577, %v577
    %v586 = vpack.c.bf16 %v578, %v578
    %v587 = vpack.c.bf16 %v579, %v579
    %v588 = vpack.c.bf16 %v580, %v580
    %v589 = vpack.c.bf16 %v581, %v581
    %v590 = vpack.c.bf16 %v582, %v582
    %v591 = vpack.c.bf16 %v583, %v583
    %592 = vrot.lane.b32.xlu0 %v304, 64
    %v593 = vpop.permute.xlu0 %592
    %v595 = vsel %vm307, %v584, 0
    %vm597 = vcmask 1043456
    %v599 = vsel %vm597, %v593, 0
    %601 = vmatpush.bf16.msra.mxu0 0
    %602 = vmatpush.bf16.msra.mxu0 0
    %603 = vmatpush.bf16.msra.mxu0 0
    %604 = vmatpush.bf16.msra.mxu0 0
    %605 = vmatpush.bf16.msra.mxu0 0
    %606 = vmatpush.bf16.msra.mxu0 0
    %607 = vmatpush.bf16.msra.mxu0 0
    %608 = vmatpush.bf16.msra.mxu0 %v599
    %609 = vmatmul.bf16.gmra.mxu0 %v595
    %v610 = vpop.f32.mrf.mxu0
    %v611 = vadd.f32 0.0, %v610
    %v612 = vpop.f32.mrf.mxu0
    %613 = vdwg.mxu0
    %614 = vrot.lane.b32.xlu0 %v328, 64
    %v615 = vpop.permute.xlu0 %614
    %v617 = vsel %vm307, %v585, 0
    %v620 = vsel %vm597, %v615, 0
    %622 = vmatpush.bf16.msra.mxu0 0
    %623 = vmatpush.bf16.msra.mxu0 0
    %624 = vmatpush.bf16.msra.mxu0 0
    %625 = vmatpush.bf16.msra.mxu0 0
    %626 = vmatpush.bf16.msra.mxu0 0
    %627 = vmatpush.bf16.msra.mxu0 0
    %628 = vmatpush.bf16.msra.mxu0 0
    %629 = vmatpush.bf16.msra.mxu0 %v620
    %630 = vmatmul.bf16.gmra.mxu0 %v617
    %v631 = vpop.f32.mrf.mxu0
    %v632 = vadd.f32 0.0, %v631
    %v633 = vpop.f32.mrf.mxu0
    %634 = vdwg.mxu0
    %635 = vrot.lane.b32.xlu0 %v351, 64
    %v636 = vpop.permute.xlu0 %635
    %v638 = vsel %vm307, %v586, 0
    %v641 = vsel %vm597, %v636, 0
    %643 = vmatpush.bf16.msra.mxu0 0
    %644 = vmatpush.bf16.msra.mxu0 0
    %645 = vmatpush.bf16.msra.mxu0 0
    %646 = vmatpush.bf16.msra.mxu0 0
    %647 = vmatpush.bf16.msra.mxu0 0
    %648 = vmatpush.bf16.msra.mxu0 0
    %649 = vmatpush.bf16.msra.mxu0 0
    %650 = vmatpush.bf16.msra.mxu0 %v641
    %651 = vmatmul.bf16.gmra.mxu0 %v638
    %v652 = vpop.f32.mrf.mxu0
    %v653 = vadd.f32 0.0, %v652
    %v654 = vpop.f32.mrf.mxu0
    %655 = vdwg.mxu0
    %656 = vrot.lane.b32.xlu0 %v374, 64
    %v657 = vpop.permute.xlu0 %656
    %v659 = vsel %vm307, %v587, 0
    %v662 = vsel %vm597, %v657, 0
    %664 = vmatpush.bf16.msra.mxu0 0
    %665 = vmatpush.bf16.msra.mxu0 0
    %666 = vmatpush.bf16.msra.mxu0 0
    %667 = vmatpush.bf16.msra.mxu0 0
    %668 = vmatpush.bf16.msra.mxu0 0
    %669 = vmatpush.bf16.msra.mxu0 0
    %670 = vmatpush.bf16.msra.mxu0 0
    %671 = vmatpush.bf16.msra.mxu0 %v662
    %672 = vmatmul.bf16.gmra.mxu0 %v659
    %v673 = vpop.f32.mrf.mxu0
    %v674 = vadd.f32 0.0, %v673
    %v675 = vpop.f32.mrf.mxu0
    %676 = vdwg.mxu0
    %677 = vrot.lane.b32.xlu0 %v397, 64
    %v678 = vpop.permute.xlu0 %677
    %v680 = vsel %vm307, %v588, 0
    %v683 = vsel %vm597, %v678, 0
    %685 = vmatpush.bf16.msra.mxu0 0
    %686 = vmatpush.bf16.msra.mxu0 0
    %687 = vmatpush.bf16.msra.mxu0 0
    %688 = vmatpush.bf16.msra.mxu0 0
    %689 = vmatpush.bf16.msra.mxu0 0
    %690 = vmatpush.bf16.msra.mxu0 0
    %691 = vmatpush.bf16.msra.mxu0 0
    %692 = vmatpush.bf16.msra.mxu0 %v683
    %693 = vmatmul.bf16.gmra.mxu0 %v680
    %v694 = vpop.f32.mrf.mxu0
    %v695 = vadd.f32 0.0, %v694
    %v696 = vpop.f32.mrf.mxu0
    %697 = vdwg.mxu0
    %698 = vrot.lane.b32.xlu0 %v420, 64
    %v699 = vpop.permute.xlu0 %698
    %v701 = vsel %vm307, %v589, 0
    %v704 = vsel %vm597, %v699, 0
    %706 = vmatpush.bf16.msra.mxu0 0
    %707 = vmatpush.bf16.msra.mxu0 0
    %708 = vmatpush.bf16.msra.mxu0 0
    %709 = vmatpush.bf16.msra.mxu0 0
    %710 = vmatpush.bf16.msra.mxu0 0
    %711 = vmatpush.bf16.msra.mxu0 0
    %712 = vmatpush.bf16.msra.mxu0 0
    %713 = vmatpush.bf16.msra.mxu0 %v704
    %714 = vmatmul.bf16.gmra.mxu0 %v701
    %v715 = vpop.f32.mrf.mxu0
    %v716 = vadd.f32 0.0, %v715
    %v717 = vpop.f32.mrf.mxu0
    %718 = vdwg.mxu0
    %719 = vrot.lane.b32.xlu0 %v443, 64
    %v720 = vpop.permute.xlu0 %719
    %v722 = vsel %vm307, %v590, 0
    %v725 = vsel %vm597, %v720, 0
    %727 = vmatpush.bf16.msra.mxu0 0
    %728 = vmatpush.bf16.msra.mxu0 0
    %729 = vmatpush.bf16.msra.mxu0 0
    %730 = vmatpush.bf16.msra.mxu0 0
    %731 = vmatpush.bf16.msra.mxu0 0
    %732 = vmatpush.bf16.msra.mxu0 0
    %733 = vmatpush.bf16.msra.mxu0 0
    %734 = vmatpush.bf16.msra.mxu0 %v725
    %735 = vmatmul.bf16.gmra.mxu0 %v722
    %v736 = vpop.f32.mrf.mxu0
    %v737 = vadd.f32 0.0, %v736
    %v738 = vpop.f32.mrf.mxu0
    %739 = vdwg.mxu0
    %740 = vrot.lane.b32.xlu0 %v466, 64
    %v741 = vpop.permute.xlu0 %740
    %v743 = vsel %vm307, %v591, 0
    %v746 = vsel %vm597, %v741, 0
    %748 = vmatpush.bf16.msra.mxu0 0
    %749 = vmatpush.bf16.msra.mxu0 0
    %750 = vmatpush.bf16.msra.mxu0 0
    %751 = vmatpush.bf16.msra.mxu0 0
    %752 = vmatpush.bf16.msra.mxu0 0
    %753 = vmatpush.bf16.msra.mxu0 0
    %754 = vmatpush.bf16.msra.mxu0 0
    %755 = vmatpush.bf16.msra.mxu0 %v746
    %756 = vmatmul.bf16.gmra.mxu0 %v743
    %v757 = vpop.f32.mrf.mxu0
    %v758 = vadd.f32 0.0, %v757
    %v759 = vpop.f32.mrf.mxu0
    %760 = vdwg.mxu0
    %v761 = vpack.c.bf16 %v611, %v611
    %v762 = vpack.c.bf16 %v632, %v632
    %v763 = vpack.c.bf16 %v653, %v653
    %v764 = vpack.c.bf16 %v674, %v674
    %v765 = vpack.c.bf16 %v695, %v695
    %v766 = vpack.c.bf16 %v716, %v716
    %v767 = vpack.c.bf16 %v737, %v737
    %v768 = vpack.c.bf16 %v758, %v758
    %v770 = vsel %vm307, %v761, 0
    %v773 = vsel %vm597, %v234, 0
    %775 = vmatpush.bf16.msra.mxu0 0
    %776 = vmatpush.bf16.msra.mxu0 0
    %777 = vmatpush.bf16.msra.mxu0 0
    %778 = vmatpush.bf16.msra.mxu0 0
    %779 = vmatpush.bf16.msra.mxu0 0
    %780 = vmatpush.bf16.msra.mxu0 0
    %781 = vmatpush.bf16.msra.mxu0 0
    %782 = vmatpush.bf16.msra.mxu0 %v773
    %783 = vmatmul.bf16.gmra.mxu0 %v770
    %v784 = vpop.f32.mrf.mxu0
    %v785 = vadd.f32 0.0, %v784
    %v786 = vpop.f32.mrf.mxu0
    %787 = vdwg.mxu0
    %v789 = vsel %vm307, %v762, 0
    %v792 = vsel %vm597, %v235, 0
    %794 = vmatpush.bf16.msra.mxu0 0
    %795 = vmatpush.bf16.msra.mxu0 0
    %796 = vmatpush.bf16.msra.mxu0 0
    %797 = vmatpush.bf16.msra.mxu0 0
    %798 = vmatpush.bf16.msra.mxu0 0
    %799 = vmatpush.bf16.msra.mxu0 0
    %800 = vmatpush.bf16.msra.mxu0 0
    %801 = vmatpush.bf16.msra.mxu0 %v792
    %802 = vmatmul.bf16.gmra.mxu0 %v789
    %v803 = vpop.f32.mrf.mxu0
    %v804 = vadd.f32 0.0, %v803
    %v805 = vpop.f32.mrf.mxu0
    %806 = vdwg.mxu0
    %v808 = vsel %vm307, %v763, 0
    %v811 = vsel %vm597, %v236, 0
    %813 = vmatpush.bf16.msra.mxu0 0
    %814 = vmatpush.bf16.msra.mxu0 0
    %815 = vmatpush.bf16.msra.mxu0 0
    %816 = vmatpush.bf16.msra.mxu0 0
    %817 = vmatpush.bf16.msra.mxu0 0
    %818 = vmatpush.bf16.msra.mxu0 0
    %819 = vmatpush.bf16.msra.mxu0 0
    %820 = vmatpush.bf16.msra.mxu0 %v811
    %821 = vmatmul.bf16.gmra.mxu0 %v808
    %v822 = vpop.f32.mrf.mxu0
    %v823 = vadd.f32 0.0, %v822
    %v824 = vpop.f32.mrf.mxu0
    %825 = vdwg.mxu0
    %v827 = vsel %vm307, %v764, 0
    %v830 = vsel %vm597, %v237, 0
    %832 = vmatpush.bf16.msra.mxu0 0
    %833 = vmatpush.bf16.msra.mxu0 0
    %834 = vmatpush.bf16.msra.mxu0 0
    %835 = vmatpush.bf16.msra.mxu0 0
    %836 = vmatpush.bf16.msra.mxu0 0
    %837 = vmatpush.bf16.msra.mxu0 0
    %838 = vmatpush.bf16.msra.mxu0 0
    %839 = vmatpush.bf16.msra.mxu0 %v830
    %840 = vmatmul.bf16.gmra.mxu0 %v827
    %v841 = vpop.f32.mrf.mxu0
    %v842 = vadd.f32 0.0, %v841
    %v843 = vpop.f32.mrf.mxu0
    %844 = vdwg.mxu0
    %v846 = vsel %vm307, %v765, 0
    %v849 = vsel %vm597, %v238, 0
    %851 = vmatpush.bf16.msra.mxu0 0
    %852 = vmatpush.bf16.msra.mxu0 0
    %853 = vmatpush.bf16.msra.mxu0 0
    %854 = vmatpush.bf16.msra.mxu0 0
    %855 = vmatpush.bf16.msra.mxu0 0
    %856 = vmatpush.bf16.msra.mxu0 0
    %857 = vmatpush.bf16.msra.mxu0 0
    %858 = vmatpush.bf16.msra.mxu0 %v849
    %859 = vmatmul.bf16.gmra.mxu0 %v846
    %v860 = vpop.f32.mrf.mxu0
    %v861 = vadd.f32 0.0, %v860
    %v862 = vpop.f32.mrf.mxu0
    %863 = vdwg.mxu0
    %v865 = vsel %vm307, %v766, 0
    %v868 = vsel %vm597, %v239, 0
    %870 = vmatpush.bf16.msra.mxu0 0
    %871 = vmatpush.bf16.msra.mxu0 0
    %872 = vmatpush.bf16.msra.mxu0 0
    %873 = vmatpush.bf16.msra.mxu0 0
    %874 = vmatpush.bf16.msra.mxu0 0
    %875 = vmatpush.bf16.msra.mxu0 0
    %876 = vmatpush.bf16.msra.mxu0 0
    %877 = vmatpush.bf16.msra.mxu0 %v868
    %878 = vmatmul.bf16.gmra.mxu0 %v865
    %v879 = vpop.f32.mrf.mxu0
    %v880 = vadd.f32 0.0, %v879
    %v881 = vpop.f32.mrf.mxu0
    %882 = vdwg.mxu0
    %v884 = vsel %vm307, %v767, 0
    %v887 = vsel %vm597, %v240, 0
    %889 = vmatpush.bf16.msra.mxu0 0
    %890 = vmatpush.bf16.msra.mxu0 0
    %891 = vmatpush.bf16.msra.mxu0 0
    %892 = vmatpush.bf16.msra.mxu0 0
    %893 = vmatpush.bf16.msra.mxu0 0
    %894 = vmatpush.bf16.msra.mxu0 0
    %895 = vmatpush.bf16.msra.mxu0 0
    %896 = vmatpush.bf16.msra.mxu0 %v887
    %897 = vmatmul.bf16.gmra.mxu0 %v884
    %v898 = vpop.f32.mrf.mxu0
    %v899 = vadd.f32 0.0, %v898
    %v900 = vpop.f32.mrf.mxu0
    %901 = vdwg.mxu0
    %v903 = vsel %vm307, %v768, 0
    %v906 = vsel %vm597, %v241, 0
    %908 = vmatpush.bf16.msra.mxu0 0
    %909 = vmatpush.bf16.msra.mxu0 0
    %910 = vmatpush.bf16.msra.mxu0 0
    %911 = vmatpush.bf16.msra.mxu0 0
    %912 = vmatpush.bf16.msra.mxu0 0
    %913 = vmatpush.bf16.msra.mxu0 0
    %914 = vmatpush.bf16.msra.mxu0 0
    %915 = vmatpush.bf16.msra.mxu0 %v906
    %916 = vmatmul.bf16.gmra.mxu0 %v903
    %v917 = vpop.f32.mrf.mxu0
    %v918 = vadd.f32 0.0, %v917
    %v919 = vpop.f32.mrf.mxu0
    %920 = vdwg.mxu0
    %v921 = vsel %vm194, %v785, 0.0
    %v922 = vsel %vm194, %v823, 0.0
    %v923 = vadd.f32 %v921, %v922
    %v924 = vsel %vm194, %v861, 0.0
    %v925 = vadd.f32 %v923, %v924
    %v926 = vsel %vm194, %v899, 0.0
    %v927 = vadd.f32 %v925, %v926
    %v928 = vsel %vm194, %v804, 0.0
    %v929 = vsel %vm194, %v842, 0.0
    %v930 = vadd.f32 %v928, %v929
    %v931 = vsel %vm194, %v880, 0.0
    %v932 = vadd.f32 %v930, %v931
    %v933 = vsel %vm194, %v918, 0.0
    %v934 = vadd.f32 %v932, %v933
    %v935 = vperm.slane %v250, 0
    %v936 = vadd.f32 %v927, %v935
    %v937 = vadd.f32 %v934, %v935
    %v938 = vadd.f32 %v112, %v936
    %v939 = vadd.f32 %v114, %v937
    %v940 = vsel %vm194, %v938, 0.0
    %941 = vadd.xlane.f32.xlu0 %v940
    %v942 = vpop.xlane.xlu0 %941
    %v943 = vsel %vm194, %v939, 0.0
    %944 = vadd.xlane.f32.xlu0 %v943
    %v945 = vpop.xlane.xlu0 %944
    %v946 = vrcp.pop 32.0
    %v947 = vmul.f32 32.0, %v946
    %v948 = vsub.f32 1.0, %v947
    %v949 = vmul.f32 %v946, %v948
    %v950 = vadd.f32 %v946, %v949
    %vm951 = vweird.f32 %v946
    %v952 = vsel %vm951, %v946, %v950
    %v953 = vmul.f32 %v942, %v952
    %v954 = vmul.f32 %v945, %v952
    %v955 = vsub.f32 %v938, %v953
    %v956 = vsub.f32 %v939, %v954
    %v957 = vmul.f32 %v955, %v955
    %v958 = vmul.f32 %v956, %v956
    %v959 = vsel %vm194, %v957, 0.0
    %960 = vadd.xlane.f32.xlu0 %v959
    %v961 = vpop.xlane.xlu0 %960
    %v962 = vsel %vm194, %v958, 0.0
    %963 = vadd.xlane.f32.xlu0 %v962
    %v964 = vpop.xlane.xlu0 %963
    %v965 = vmul.f32 %v961, %v952
    %v966 = vmul.f32 %v964, %v952
    %v967 = vadd.f32 %v965, 1e-05
    %v968 = vadd.f32 %v966, 1e-05
    %v969 = vrsqrt.pop %v967
    %v970 = vmul.f32 %v969, %v967
    %v971 = vmul.f32 %v970, %v969
    %v972 = vmul.f32 0.5, %v971
    %v973 = vsub.f32 1.5, %v972
    %v974 = vmul.f32 %v969, %v973
    %vm975 = vweird.f32 %v967
    %vm976 = vweird.f32 %v969
    %vm977 = vmor %vm975, %vm976
    %v978 = vsel %vm977, %v969, %v974
    %v979 = vrsqrt.pop %v968
    %v980 = vmul.f32 %v979, %v968
    %v981 = vmul.f32 %v980, %v979
    %v982 = vmul.f32 0.5, %v981
    %v983 = vsub.f32 1.5, %v982
    %v984 = vmul.f32 %v979, %v983
    %vm985 = vweird.f32 %v968
    %vm986 = vweird.f32 %v979
    %vm987 = vmor %vm985, %vm986
    %v988 = vsel %vm987, %v979, %v984
    %v989 = vmul.f32 %v955, %v978
    %v990 = vmul.f32 %v956, %v988
    %v991 = vperm.slane %v251, 0
    %v992 = vmul.f32 %v989, %v991
    %v993 = vmul.f32 %v990, %v991
    %v994 = vperm.slane %v252, 0
    %v995 = vadd.f32 %v992, %v994
    %v996 = vadd.f32 %v993, %v994
    %v997 = vpack.c.bf16 %v996, %v995
    %v999 = vperm.slane %v256, 0
    %v1005 = vunpack.c.l.b16 %v230
    %v1006 = vunpack.c.l.b16 %v231
    %v1007 = vunpack.c.l.b16 %v232
    %v1008 = vunpack.c.l.b16 %v233
    %v1009 = vpack.c.b16 %v1006, %v1005
    %v1010 = vpack.c.b16 %v1008, %v1007
    %v1014 = vsel %vm194, %v997, 0
    %1016 = vmatpush.bf16.msra.mxu0 0
    %1017 = vmatpush.bf16.msra.mxu0 0
    %1018 = vmatpush.bf16.msra.mxu0 0
    %1019 = vmatpush.bf16.msra.mxu0 0
    %1020 = vmatpush.bf16.msra.mxu0 0
    %1021 = vmatpush.bf16.msra.mxu0 0
    %1022 = vmatpush.bf16.msra.mxu0 %v1010
    %1023 = vmatpush.bf16.msra.mxu0 %v1009
    %1024 = vmatmul.bf16.gmra.mxu0 %v1014
    %v1025 = vpop.f32.mrf.mxu0
    %v1026 = vadd.f32 %v999, %v1025
    %v1027 = vpop.f32.mrf.mxu0
    %v1028 = vadd.f32 %v999, %v1027
    %1029 = vdwg.mxu0
    %v1030 = vmax.f32 %v1026, 0.0
    %v1031 = vmax.f32 %v1028, 0.0
    %v1032 = vpack.c.bf16 %v1031, %v1030
    %v1033 = vperm.slane %v253, 0
    %v1042 = vunpack.c.l.b16 %v242
    %v1043 = vunpack.c.l.b16 %v243
    %v1044 = vunpack.c.l.b16 %v244
    %v1045 = vunpack.c.l.b16 %v245
    %v1046 = vunpack.c.l.b16 %v246
    %v1047 = vunpack.c.l.b16 %v247
    %v1048 = vunpack.c.l.b16 %v248
    %v1049 = vunpack.c.l.b16 %v249
    %v1050 = vpack.c.b16 %v1043, %v1042
    %v1051 = vpack.c.b16 %v1045, %v1044
    %v1052 = vpack.c.b16 %v1047, %v1046
    %v1053 = vpack.c.b16 %v1049, %v1048
    %vm1058 = vcmask 523264
    %v1060 = vsel %vm1058, %v1032, 0
    %1062 = vmatpush.bf16.msra.mxu0 0
    %1063 = vmatpush.bf16.msra.mxu0 0
    %1064 = vmatpush.bf16.msra.mxu0 0
    %1065 = vmatpush.bf16.msra.mxu0 0
    %1066 = vmatpush.bf16.msra.mxu0 %v1053
    %1067 = vmatpush.bf16.msra.mxu0 %v1052
    %1068 = vmatpush.bf16.msra.mxu0 %v1051
    %1069 = vmatpush.bf16.msra.mxu0 %v1050
    %1070 = vmatmul.bf16.gmra.mxu0 %v1060
    %v1071 = vpop.f32.mrf.mxu0
    %v1072 = vadd.f32 %v1033, %v1071
    %v1073 = vpop.f32.mrf.mxu0
    %v1074 = vadd.f32 %v1033, %v1073
    %1075 = vdwg.mxu0
    %v1076 = vadd.f32 %v995, %v1072
    %v1077 = vadd.f32 %v996, %v1074
    %v1078 = vsel %vm194, %v1076, 0.0
    %1079 = vadd.xlane.f32.xlu0 %v1078
    %v1080 = vpop.xlane.xlu0 %1079
    %v1081 = vsel %vm194, %v1077, 0.0
    %1082 = vadd.xlane.f32.xlu0 %v1081
    %v1083 = vpop.xlane.xlu0 %1082
    %v1084 = vmul.f32 %v1080, %v952
    %v1085 = vmul.f32 %v1083, %v952
    %v1086 = vsub.f32 %v1076, %v1084
    %v1087 = vsub.f32 %v1077, %v1085
    %v1088 = vmul.f32 %v1086, %v1086
    %v1089 = vmul.f32 %v1087, %v1087
    %v1090 = vsel %vm194, %v1088, 0.0
    %1091 = vadd.xlane.f32.xlu0 %v1090
    %v1092 = vpop.xlane.xlu0 %1091
    %v1093 = vsel %vm194, %v1089, 0.0
    %1094 = vadd.xlane.f32.xlu0 %v1093
    %v1095 = vpop.xlane.xlu0 %1094
    %v1096 = vmul.f32 %v1092, %v952
    %v1097 = vmul.f32 %v1095, %v952
    %v1098 = vadd.f32 %v1096, 1e-05
    %v1099 = vadd.f32 %v1097, 1e-05
    %v1100 = vrsqrt.pop %v1098
    %v1101 = vmul.f32 %v1100, %v1098
    %v1102 = vmul.f32 %v1101, %v1100
    %v1103 = vmul.f32 0.5, %v1102
    %v1104 = vsub.f32 1.5, %v1103
    %v1105 = vmul.f32 %v1100, %v1104
    %vm1106 = vweird.f32 %v1098
    %vm1107 = vweird.f32 %v1100
    %vm1108 = vmor %vm1106, %vm1107
    %v1109 = vsel %vm1108, %v1100, %v1105
    %v1110 = vrsqrt.pop %v1099
    %v1111 = vmul.f32 %v1110, %v1099
    %v1112 = vmul.f32 %v1111, %v1110
    %v1113 = vmul.f32 0.5, %v1112
    %v1114 = vsub.f32 1.5, %v1113
    %v1115 = vmul.f32 %v1110, %v1114
    %vm1116 = vweird.f32 %v1099
    %vm1117 = vweird.f32 %v1110
    %vm1118 = vmor %vm1116, %vm1117
    %v1119 = vsel %vm1118, %v1110, %v1115
    %v1120 = vmul.f32 %v1086, %v1109
    %v1121 = vmul.f32 %v1087, %v1119
    %v1122 = vperm.slane %v254, 0
    %v1123 = vmul.f32 %v1120, %v1122
    %v1124 = vmul.f32 %v1121, %v1122
    %v1125 = vperm.slane %v255, 0
    %v1126 = vadd.f32 %v1123, %v1125
    %v1127 = vadd.f32 %v1124, %v1125
    %s1128 = scalar_lea.vmem %s2, 32
    %v1129 = vld [vmem:[%s1128] sm:$0xf]
    %v1130 = vld [vmem:[%s1128 + $0x8] sm:$0xf]
    %v1131 = vld [vmem:[%s1128 + $0x10] sm:$0xf]
    %v1132 = vld [vmem:[%s1128 + $0x18] sm:$0xf]
    %v1133 = vld [vmem:[%s1128 + $0x4] sm:$0xf]
    %v1134 = vld [vmem:[%s1128 + $0xc] sm:$0xf]
    %v1135 = vld [vmem:[%s1128 + $0x14] sm:$0xf]
    %v1136 = vld [vmem:[%s1128 + $0x1c] sm:$0xf]
    %s1137 = scalar_lea.vmem [#allocation5], 32
    %v1138 = vld [vmem:[%s1137] sm:$0xf]
    %v1139 = vld [vmem:[%s1137 + $0x4] sm:$0xf]
    %v1140 = vld [vmem:[%s1137 + $0x8] sm:$0xf]
    %v1141 = vld [vmem:[%s1137 + $0xc] sm:$0xf]
    %v1142 = vld [vmem:[%s1137 + $0x10] sm:$0xf]
    %v1143 = vld [vmem:[%s1137 + $0x14] sm:$0xf]
    %v1144 = vld [vmem:[%s1137 + $0x18] sm:$0xf]
    %v1145 = vld [vmem:[%s1137 + $0x1c] sm:$0xf]
    %s1146 = scalar_lea.vmem %s4, 32
    %v1147 = vld [vmem:[%s1146] sm:$0xf]
    %v1148 = vld [vmem:[%s1146 + $0x4] sm:$0xf]
    %v1149 = vld [vmem:[%s1146 + $0x8] sm:$0xf]
    %v1150 = vld [vmem:[%s1146 + $0xc] sm:$0xf]
    %v1151 = vld [vmem:[%s1146 + $0x10] sm:$0xf]
    %v1152 = vld [vmem:[%s1146 + $0x14] sm:$0xf]
    %v1153 = vld [vmem:[%s1146 + $0x18] sm:$0xf]
    %v1154 = vld [vmem:[%s1146 + $0x1c] sm:$0xf]
    %s1155 = scalar_lea.vmem %s7, 8
    %v1156 = vld [vmem:[%s1155] sm:$0x1]
    %v1157 = vld [vmem:[%s1155 + $0x1] sm:$0x1]
    %v1158 = vld [vmem:[%s1155 + $0x2] sm:$0x1]
    %v1159 = vld [vmem:[%s1155 + $0x3] sm:$0x1]
    %v1160 = vld [vmem:[%s1155 + $0x4] sm:$0x1]
    %v1161 = vld [vmem:[%s1155 + $0x5] sm:$0x1]
    %s1162 = scalar_lea.vmem %s8, 1
    %v1163 = vld [vmem:[%s1162] sm:$0x1]
    %v1164 = vpack.c.bf16 %v1127, %v1126
    %v1169 = vunpack.c.l.b16 %v1129
    %v1170 = vunpack.c.l.b16 %v1130
    %v1171 = vunpack.c.l.b16 %v1131
    %v1172 = vunpack.c.l.b16 %v1132
    %v1173 = vpack.c.b16 %v1170, %v1169
    %v1174 = vpack.c.b16 %v1172, %v1171
    %v1178 = vsel %vm194, %v1164, 0
    %1180 = vmatpush.bf16.msra.mxu0 0
    %1181 = vmatpush.bf16.msra.mxu0 0
    %1182 = vmatpush.bf16.msra.mxu0 0
    %1183 = vmatpush.bf16.msra.mxu0 0
    %1184 = vmatpush.bf16.msra.mxu0 0
    %1185 = vmatpush.bf16.msra.mxu0 0
    %1186 = vmatpush.bf16.msra.mxu0 %v1174
    %1187 = vmatpush.bf16.msra.mxu0 %v1173
    %1188 = vmatmul.bf16.gmra.mxu0 %v1178
    %v1189 = vpop.f32.mrf.mxu0
    %v1190 = vadd.f32 %v222, %v1189
    %v1191 = vpop.f32.mrf.mxu0
    %v1192 = vadd.f32 %v224, %v1191
    %1193 = vdwg.mxu0
    %v1194 = vpack.c.bf16 %v1190, %v1190
    %v1195 = vpack.c.bf16 %v1192, %v1192
    %1198 = vrot.lane.b32.xlu0 %v1194, 120
    %v1199 = vpop.permute.xlu0 %1198
    %1200 = vrot.lane.b32.xlu0 %v1195, 120
    %v1201 = vpop.permute.xlu0 %1200
    %1202 = vrot.lane.b32.xlu0 %v1194, 112
    %v1203 = vpop.permute.xlu0 %1202
    %1204 = vrot.lane.b32.xlu0 %v1195, 112
    %v1205 = vpop.permute.xlu0 %1204
    %1206 = vrot.lane.b32.xlu0 %v1194, 104
    %v1207 = vpop.permute.xlu0 %1206
    %1208 = vrot.lane.b32.xlu0 %v1195, 104
    %v1209 = vpop.permute.xlu0 %1208
    %v1210 = vunpack.c.l.b16 %v1194
    %v1211 = vpack.c.b16 %v1210, %v1210
    %1212 = vrot.lane.b32.xlu0 %v1211, 96
    %v1213 = vpop.permute.xlu0 %1212
    %v1215 = vsel %vm307, %v1194, 0
    %v1218 = vsel %vm307, %v1213, 0
    %1220 = vmatpush.bf16.xpose.msra.mxu0 0
    %1221 = vmatpush.bf16.xpose.msra.mxu0 0
    %1222 = vmatpush.bf16.xpose.msra.mxu0 0
    %1223 = vmatpush.bf16.xpose.msra.mxu0 0
    %1224 = vmatpush.bf16.xpose.msra.mxu0 0
    %1225 = vmatpush.bf16.xpose.msra.mxu0 0
    %1226 = vmatpush.bf16.xpose.msra.mxu0 0
    %1227 = vmatpush.bf16.xpose.msra.mxu0 %v1218
    %1228 = vmatmul.bf16.gmra.mxu0 %v1215
    %v1229 = vpop.f32.mrf.mxu0
    %v1230 = vadd.f32 0.0, %v1229
    %v1231 = vpop.f32.mrf.mxu0
    %1232 = vdwg.mxu0
    %v1233 = vunpack.c.l.b16 %v1195
    %v1234 = vpack.c.b16 %v1233, %v1233
    %1235 = vrot.lane.b32.xlu0 %v1234, 96
    %v1236 = vpop.permute.xlu0 %1235
    %v1238 = vsel %vm307, %v1195, 0
    %v1241 = vsel %vm307, %v1236, 0
    %1243 = vmatpush.bf16.xpose.msra.mxu0 0
    %1244 = vmatpush.bf16.xpose.msra.mxu0 0
    %1245 = vmatpush.bf16.xpose.msra.mxu0 0
    %1246 = vmatpush.bf16.xpose.msra.mxu0 0
    %1247 = vmatpush.bf16.xpose.msra.mxu0 0
    %1248 = vmatpush.bf16.xpose.msra.mxu0 0
    %1249 = vmatpush.bf16.xpose.msra.mxu0 0
    %1250 = vmatpush.bf16.xpose.msra.mxu0 %v1241
    %1251 = vmatmul.bf16.gmra.mxu0 %v1238
    %v1252 = vpop.f32.mrf.mxu0
    %v1253 = vadd.f32 0.0, %v1252
    %v1254 = vpop.f32.mrf.mxu0
    %1255 = vdwg.mxu0
    %v1256 = vunpack.c.l.b16 %v1199
    %v1257 = vpack.c.b16 %v1256, %v1256
    %1258 = vrot.lane.b32.xlu0 %v1257, 96
    %v1259 = vpop.permute.xlu0 %1258
    %v1261 = vsel %vm307, %v1199, 0
    %v1264 = vsel %vm307, %v1259, 0
    %1266 = vmatpush.bf16.xpose.msra.mxu0 0
    %1267 = vmatpush.bf16.xpose.msra.mxu0 0
    %1268 = vmatpush.bf16.xpose.msra.mxu0 0
    %1269 = vmatpush.bf16.xpose.msra.mxu0 0
    %1270 = vmatpush.bf16.xpose.msra.mxu0 0
    %1271 = vmatpush.bf16.xpose.msra.mxu0 0
    %1272 = vmatpush.bf16.xpose.msra.mxu0 0
    %1273 = vmatpush.bf16.xpose.msra.mxu0 %v1264
    %1274 = vmatmul.bf16.gmra.mxu0 %v1261
    %v1275 = vpop.f32.mrf.mxu0
    %v1276 = vadd.f32 0.0, %v1275
    %v1277 = vpop.f32.mrf.mxu0
    %1278 = vdwg.mxu0
    %v1279 = vunpack.c.l.b16 %v1201
    %v1280 = vpack.c.b16 %v1279, %v1279
    %1281 = vrot.lane.b32.xlu0 %v1280, 96
    %v1282 = vpop.permute.xlu0 %1281
    %v1284 = vsel %vm307, %v1201, 0
    %v1287 = vsel %vm307, %v1282, 0
    %1289 = vmatpush.bf16.xpose.msra.mxu0 0
    %1290 = vmatpush.bf16.xpose.msra.mxu0 0
    %1291 = vmatpush.bf16.xpose.msra.mxu0 0
    %1292 = vmatpush.bf16.xpose.msra.mxu0 0
    %1293 = vmatpush.bf16.xpose.msra.mxu0 0
    %1294 = vmatpush.bf16.xpose.msra.mxu0 0
    %1295 = vmatpush.bf16.xpose.msra.mxu0 0
    %1296 = vmatpush.bf16.xpose.msra.mxu0 %v1287
    %1297 = vmatmul.bf16.gmra.mxu0 %v1284
    %v1298 = vpop.f32.mrf.mxu0
    %v1299 = vadd.f32 0.0, %v1298
    %v1300 = vpop.f32.mrf.mxu0
    %1301 = vdwg.mxu0
    %v1302 = vunpack.c.l.b16 %v1203
    %v1303 = vpack.c.b16 %v1302, %v1302
    %1304 = vrot.lane.b32.xlu0 %v1303, 96
    %v1305 = vpop.permute.xlu0 %1304
    %v1307 = vsel %vm307, %v1203, 0
    %v1310 = vsel %vm307, %v1305, 0
    %1312 = vmatpush.bf16.xpose.msra.mxu0 0
    %1313 = vmatpush.bf16.xpose.msra.mxu0 0
    %1314 = vmatpush.bf16.xpose.msra.mxu0 0
    %1315 = vmatpush.bf16.xpose.msra.mxu0 0
    %1316 = vmatpush.bf16.xpose.msra.mxu0 0
    %1317 = vmatpush.bf16.xpose.msra.mxu0 0
    %1318 = vmatpush.bf16.xpose.msra.mxu0 0
    %1319 = vmatpush.bf16.xpose.msra.mxu0 %v1310
    %1320 = vmatmul.bf16.gmra.mxu0 %v1307
    %v1321 = vpop.f32.mrf.mxu0
    %v1322 = vadd.f32 0.0, %v1321
    %v1323 = vpop.f32.mrf.mxu0
    %1324 = vdwg.mxu0
    %v1325 = vunpack.c.l.b16 %v1205
    %v1326 = vpack.c.b16 %v1325, %v1325
    %1327 = vrot.lane.b32.xlu0 %v1326, 96
    %v1328 = vpop.permute.xlu0 %1327
    %v1330 = vsel %vm307, %v1205, 0
    %v1333 = vsel %vm307, %v1328, 0
    %1335 = vmatpush.bf16.xpose.msra.mxu0 0
    %1336 = vmatpush.bf16.xpose.msra.mxu0 0
    %1337 = vmatpush.bf16.xpose.msra.mxu0 0
    %1338 = vmatpush.bf16.xpose.msra.mxu0 0
    %1339 = vmatpush.bf16.xpose.msra.mxu0 0
    %1340 = vmatpush.bf16.xpose.msra.mxu0 0
    %1341 = vmatpush.bf16.xpose.msra.mxu0 0
    %1342 = vmatpush.bf16.xpose.msra.mxu0 %v1333
    %1343 = vmatmul.bf16.gmra.mxu0 %v1330
    %v1344 = vpop.f32.mrf.mxu0
    %v1345 = vadd.f32 0.0, %v1344
    %v1346 = vpop.f32.mrf.mxu0
    %1347 = vdwg.mxu0
    %v1348 = vunpack.c.l.b16 %v1207
    %v1349 = vpack.c.b16 %v1348, %v1348
    %1350 = vrot.lane.b32.xlu0 %v1349, 96
    %v1351 = vpop.permute.xlu0 %1350
    %v1353 = vsel %vm307, %v1207, 0
    %v1356 = vsel %vm307, %v1351, 0
    %1358 = vmatpush.bf16.xpose.msra.mxu0 0
    %1359 = vmatpush.bf16.xpose.msra.mxu0 0
    %1360 = vmatpush.bf16.xpose.msra.mxu0 0
    %1361 = vmatpush.bf16.xpose.msra.mxu0 0
    %1362 = vmatpush.bf16.xpose.msra.mxu0 0
    %1363 = vmatpush.bf16.xpose.msra.mxu0 0
    %1364 = vmatpush.bf16.xpose.msra.mxu0 0
    %1365 = vmatpush.bf16.xpose.msra.mxu0 %v1356
    %1366 = vmatmul.bf16.gmra.mxu0 %v1353
    %v1367 = vpop.f32.mrf.mxu0
    %v1368 = vadd.f32 0.0, %v1367
    %v1369 = vpop.f32.mrf.mxu0
    %1370 = vdwg.mxu0
    %v1371 = vunpack.c.l.b16 %v1209
    %v1372 = vpack.c.b16 %v1371, %v1371
    %1373 = vrot.lane.b32.xlu0 %v1372, 96
    %v1374 = vpop.permute.xlu0 %1373
    %v1376 = vsel %vm307, %v1209, 0
    %v1379 = vsel %vm307, %v1374, 0
    %1381 = vmatpush.bf16.xpose.msra.mxu0 0
    %1382 = vmatpush.bf16.xpose.msra.mxu0 0
    %1383 = vmatpush.bf16.xpose.msra.mxu0 0
    %1384 = vmatpush.bf16.xpose.msra.mxu0 0
    %1385 = vmatpush.bf16.xpose.msra.mxu0 0
    %1386 = vmatpush.bf16.xpose.msra.mxu0 0
    %1387 = vmatpush.bf16.xpose.msra.mxu0 0
    %1388 = vmatpush.bf16.xpose.msra.mxu0 %v1379
    %1389 = vmatmul.bf16.gmra.mxu0 %v1376
    %v1390 = vpop.f32.mrf.mxu0
    %v1391 = vadd.f32 0.0, %v1390
    %v1392 = vpop.f32.mrf.mxu0
    %1393 = vdwg.mxu0
    %v1394 = vmul.f32 %v1230, 0.35355338
    %v1395 = vmul.f32 %v1253, 0.35355338
    %v1396 = vmul.f32 %v1276, 0.35355338
    %v1397 = vmul.f32 %v1299, 0.35355338
    %v1398 = vmul.f32 %v1322, 0.35355338
    %v1399 = vmul.f32 %v1345, 0.35355338
    %v1400 = vmul.f32 %v1368, 0.35355338
    %v1401 = vmul.f32 %v1391, 0.35355338
    %v1402 = vsel %vm307, %v1394, -inf
    %1403 = vmax.xlane.f32.xlu0 %v1402
    %v1404 = vpop.xlane.xlu0 %1403
    %v1405 = vsel %vm307, %v1395, -inf
    %1406 = vmax.xlane.f32.xlu0 %v1405
    %v1407 = vpop.xlane.xlu0 %1406
    %v1408 = vsel %vm307, %v1396, -inf
    %1409 = vmax.xlane.f32.xlu0 %v1408
    %v1410 = vpop.xlane.xlu0 %1409
    %v1411 = vsel %vm307, %v1397, -inf
    %1412 = vmax.xlane.f32.xlu0 %v1411
    %v1413 = vpop.xlane.xlu0 %1412
    %v1414 = vsel %vm307, %v1398, -inf
    %1415 = vmax.xlane.f32.xlu0 %v1414
    %v1416 = vpop.xlane.xlu0 %1415
    %v1417 = vsel %vm307, %v1399, -inf
    %1418 = vmax.xlane.f32.xlu0 %v1417
    %v1419 = vpop.xlane.xlu0 %1418
    %v1420 = vsel %vm307, %v1400, -inf
    %1421 = vmax.xlane.f32.xlu0 %v1420
    %v1422 = vpop.xlane.xlu0 %1421
    %v1423 = vsel %vm307, %v1401, -inf
    %1424 = vmax.xlane.f32.xlu0 %v1423
    %v1425 = vpop.xlane.xlu0 %1424
    %v1426 = vsub.f32 %v1394, %v1404
    %v1427 = vsub.f32 %v1395, %v1407
    %v1428 = vsub.f32 %v1396, %v1410
    %v1429 = vsub.f32 %v1397, %v1413
    %v1430 = vsub.f32 %v1398, %v1416
    %v1431 = vsub.f32 %v1399, %v1419
    %v1432 = vsub.f32 %v1400, %v1422
    %v1433 = vsub.f32 %v1401, %v1425
    %v1434 = vmul.f32 %v1426, 1.442695
    %v1435 = vpow.pop %v1434
    %v1436 = vmul.f32 %v1427, 1.442695
    %v1437 = vpow.pop %v1436
    %v1438 = vmul.f32 %v1428, 1.442695
    %v1439 = vpow.pop %v1438
    %v1440 = vmul.f32 %v1429, 1.442695
    %v1441 = vpow.pop %v1440
    %v1442 = vmul.f32 %v1430, 1.442695
    %v1443 = vpow.pop %v1442
    %v1444 = vmul.f32 %v1431, 1.442695
    %v1445 = vpow.pop %v1444
    %v1446 = vmul.f32 %v1432, 1.442695
    %v1447 = vpow.pop %v1446
    %v1448 = vmul.f32 %v1433, 1.442695
    %v1449 = vpow.pop %v1448
    %v1450 = vsel %vm307, %v1435, 0.0
    %1451 = vadd.xlane.f32.xlu0 %v1450
    %v1452 = vpop.xlane.xlu0 %1451
    %v1453 = vsel %vm307, %v1437, 0.0
    %1454 = vadd.xlane.f32.xlu0 %v1453
    %v1455 = vpop.xlane.xlu0 %1454
    %v1456 = vsel %vm307, %v1439, 0.0
    %1457 = vadd.xlane.f32.xlu0 %v1456
    %v1458 = vpop.xlane.xlu0 %1457
    %v1459 = vsel %vm307, %v1441, 0.0
    %1460 = vadd.xlane.f32.xlu0 %v1459
    %v1461 = vpop.xlane.xlu0 %1460
    %v1462 = vsel %vm307, %v1443, 0.0
    %1463 = vadd.xlane.f32.xlu0 %v1462
    %v1464 = vpop.xlane.xlu0 %1463
    %v1465 = vsel %vm307, %v1445, 0.0
    %1466 = vadd.xlane.f32.xlu0 %v1465
    %v1467 = vpop.xlane.xlu0 %1466
    %v1468 = vsel %vm307, %v1447, 0.0
    %1469 = vadd.xlane.f32.xlu0 %v1468
    %v1470 = vpop.xlane.xlu0 %1469
    %v1471 = vsel %vm307, %v1449, 0.0
    %1472 = vadd.xlane.f32.xlu0 %v1471
    %v1473 = vpop.xlane.xlu0 %1472
    %v1474 = vrcp.pop %v1452
    %v1475 = vrcp.pop %v1455
    %v1476 = vrcp.pop %v1458
    %v1477 = vrcp.pop %v1461
    %v1478 = vrcp.pop %v1464
    %v1479 = vrcp.pop %v1467
    %v1480 = vrcp.pop %v1470
    %v1481 = vrcp.pop %v1473
    %v1482 = vmul.f32 %v1435, %v1474
    %v1483 = vmul.f32 %v1437, %v1475
    %v1484 = vmul.f32 %v1439, %v1476
    %v1485 = vmul.f32 %v1441, %v1477
    %v1486 = vmul.f32 %v1443, %v1478
    %v1487 = vmul.f32 %v1445, %v1479
    %v1488 = vmul.f32 %v1447, %v1480
    %v1489 = vmul.f32 %v1449, %v1481
    %v1490 = vpack.c.bf16 %v1482, %v1482
    %v1491 = vpack.c.bf16 %v1483, %v1483
    %v1492 = vpack.c.bf16 %v1484, %v1484
    %v1493 = vpack.c.bf16 %v1485, %v1485
    %v1494 = vpack.c.bf16 %v1486, %v1486
    %v1495 = vpack.c.bf16 %v1487, %v1487
    %v1496 = vpack.c.bf16 %v1488, %v1488
    %v1497 = vpack.c.bf16 %v1489, %v1489
    %1498 = vrot.lane.b32.xlu0 %v1211, 64
    %v1499 = vpop.permute.xlu0 %1498
    %v1501 = vsel %vm307, %v1490, 0
    %v1504 = vsel %vm597, %v1499, 0
    %1506 = vmatpush.bf16.msra.mxu0 0
    %1507 = vmatpush.bf16.msra.mxu0 0
    %1508 = vmatpush.bf16.msra.mxu0 0
    %1509 = vmatpush.bf16.msra.mxu0 0
    %1510 = vmatpush.bf16.msra.mxu0 0
    %1511 = vmatpush.bf16.msra.mxu0 0
    %1512 = vmatpush.bf16.msra.mxu0 0
    %1513 = vmatpush.bf16.msra.mxu0 %v1504
    %1514 = vmatmul.bf16.gmra.mxu0 %v1501
    %v1515 = vpop.f32.mrf.mxu0
    %v1516 = vadd.f32 0.0, %v1515
    %v1517 = vpop.f32.mrf.mxu0
    %1518 = vdwg.mxu0
    %1519 = vrot.lane.b32.xlu0 %v1234, 64
    %v1520 = vpop.permute.xlu0 %1519
    %v1522 = vsel %vm307, %v1491, 0
    %v1525 = vsel %vm597, %v1520, 0
    %1527 = vmatpush.bf16.msra.mxu0 0
    %1528 = vmatpush.bf16.msra.mxu0 0
    %1529 = vmatpush.bf16.msra.mxu0 0
    %1530 = vmatpush.bf16.msra.mxu0 0
    %1531 = vmatpush.bf16.msra.mxu0 0
    %1532 = vmatpush.bf16.msra.mxu0 0
    %1533 = vmatpush.bf16.msra.mxu0 0
    %1534 = vmatpush.bf16.msra.mxu0 %v1525
    %1535 = vmatmul.bf16.gmra.mxu0 %v1522
    %v1536 = vpop.f32.mrf.mxu0
    %v1537 = vadd.f32 0.0, %v1536
    %v1538 = vpop.f32.mrf.mxu0
    %1539 = vdwg.mxu0
    %1540 = vrot.lane.b32.xlu0 %v1257, 64
    %v1541 = vpop.permute.xlu0 %1540
    %v1543 = vsel %vm307, %v1492, 0
    %v1546 = vsel %vm597, %v1541, 0
    %1548 = vmatpush.bf16.msra.mxu0 0
    %1549 = vmatpush.bf16.msra.mxu0 0
    %1550 = vmatpush.bf16.msra.mxu0 0
    %1551 = vmatpush.bf16.msra.mxu0 0
    %1552 = vmatpush.bf16.msra.mxu0 0
    %1553 = vmatpush.bf16.msra.mxu0 0
    %1554 = vmatpush.bf16.msra.mxu0 0
    %1555 = vmatpush.bf16.msra.mxu0 %v1546
    %1556 = vmatmul.bf16.gmra.mxu0 %v1543
    %v1557 = vpop.f32.mrf.mxu0
    %v1558 = vadd.f32 0.0, %v1557
    %v1559 = vpop.f32.mrf.mxu0
    %1560 = vdwg.mxu0
    %1561 = vrot.lane.b32.xlu0 %v1280, 64
    %v1562 = vpop.permute.xlu0 %1561
    %v1564 = vsel %vm307, %v1493, 0
    %v1567 = vsel %vm597, %v1562, 0
    %1569 = vmatpush.bf16.msra.mxu0 0
    %1570 = vmatpush.bf16.msra.mxu0 0
    %1571 = vmatpush.bf16.msra.mxu0 0
    %1572 = vmatpush.bf16.msra.mxu0 0
    %1573 = vmatpush.bf16.msra.mxu0 0
    %1574 = vmatpush.bf16.msra.mxu0 0
    %1575 = vmatpush.bf16.msra.mxu0 0
    %1576 = vmatpush.bf16.msra.mxu0 %v1567
    %1577 = vmatmul.bf16.gmra.mxu0 %v1564
    %v1578 = vpop.f32.mrf.mxu0
    %v1579 = vadd.f32 0.0, %v1578
    %v1580 = vpop.f32.mrf.mxu0
    %1581 = vdwg.mxu0
    %1582 = vrot.lane.b32.xlu0 %v1303, 64
    %v1583 = vpop.permute.xlu0 %1582
    %v1585 = vsel %vm307, %v1494, 0
    %v1588 = vsel %vm597, %v1583, 0
    %1590 = vmatpush.bf16.msra.mxu0 0
    %1591 = vmatpush.bf16.msra.mxu0 0
    %1592 = vmatpush.bf16.msra.mxu0 0
    %1593 = vmatpush.bf16.msra.mxu0 0
    %1594 = vmatpush.bf16.msra.mxu0 0
    %1595 = vmatpush.bf16.msra.mxu0 0
    %1596 = vmatpush.bf16.msra.mxu0 0
    %1597 = vmatpush.bf16.msra.mxu0 %v1588
    %1598 = vmatmul.bf16.gmra.mxu0 %v1585
    %v1599 = vpop.f32.mrf.mxu0
    %v1600 = vadd.f32 0.0, %v1599
    %v1601 = vpop.f32.mrf.mxu0
    %1602 = vdwg.mxu0
    %1603 = vrot.lane.b32.xlu0 %v1326, 64
    %v1604 = vpop.permute.xlu0 %1603
    %v1606 = vsel %vm307, %v1495, 0
    %v1609 = vsel %vm597, %v1604, 0
    %1611 = vmatpush.bf16.msra.mxu0 0
    %1612 = vmatpush.bf16.msra.mxu0 0
    %1613 = vmatpush.bf16.msra.mxu0 0
    %1614 = vmatpush.bf16.msra.mxu0 0
    %1615 = vmatpush.bf16.msra.mxu0 0
    %1616 = vmatpush.bf16.msra.mxu0 0
    %1617 = vmatpush.bf16.msra.mxu0 0
    %1618 = vmatpush.bf16.msra.mxu0 %v1609
    %1619 = vmatmul.bf16.gmra.mxu0 %v1606
    %v1620 = vpop.f32.mrf.mxu0
    %v1621 = vadd.f32 0.0, %v1620
    %v1622 = vpop.f32.mrf.mxu0
    %1623 = vdwg.mxu0
    %1624 = vrot.lane.b32.xlu0 %v1349, 64
    %v1625 = vpop.permute.xlu0 %1624
    %v1627 = vsel %vm307, %v1496, 0
    %v1630 = vsel %vm597, %v1625, 0
    %1632 = vmatpush.bf16.msra.mxu0 0
    %1633 = vmatpush.bf16.msra.mxu0 0
    %1634 = vmatpush.bf16.msra.mxu0 0
    %1635 = vmatpush.bf16.msra.mxu0 0
    %1636 = vmatpush.bf16.msra.mxu0 0
    %1637 = vmatpush.bf16.msra.mxu0 0
    %1638 = vmatpush.bf16.msra.mxu0 0
    %1639 = vmatpush.bf16.msra.mxu0 %v1630
    %1640 = vmatmul.bf16.gmra.mxu0 %v1627
    %v1641 = vpop.f32.mrf.mxu0
    %v1642 = vadd.f32 0.0, %v1641
    %v1643 = vpop.f32.mrf.mxu0
    %1644 = vdwg.mxu0
    %1645 = vrot.lane.b32.xlu0 %v1372, 64
    %v1646 = vpop.permute.xlu0 %1645
    %v1648 = vsel %vm307, %v1497, 0
    %v1651 = vsel %vm597, %v1646, 0
    %1653 = vmatpush.bf16.msra.mxu0 0
    %1654 = vmatpush.bf16.msra.mxu0 0
    %1655 = vmatpush.bf16.msra.mxu0 0
    %1656 = vmatpush.bf16.msra.mxu0 0
    %1657 = vmatpush.bf16.msra.mxu0 0
    %1658 = vmatpush.bf16.msra.mxu0 0
    %1659 = vmatpush.bf16.msra.mxu0 0
    %1660 = vmatpush.bf16.msra.mxu0 %v1651
    %1661 = vmatmul.bf16.gmra.mxu0 %v1648
    %v1662 = vpop.f32.mrf.mxu0
    %v1663 = vadd.f32 0.0, %v1662
    %v1664 = vpop.f32.mrf.mxu0
    %1665 = vdwg.mxu0
    %v1666 = vpack.c.bf16 %v1516, %v1516
    %v1667 = vpack.c.bf16 %v1537, %v1537
    %v1668 = vpack.c.bf16 %v1558, %v1558
    %v1669 = vpack.c.bf16 %v1579, %v1579
    %v1670 = vpack.c.bf16 %v1600, %v1600
    %v1671 = vpack.c.bf16 %v1621, %v1621
    %v1672 = vpack.c.bf16 %v1642, %v1642
    %v1673 = vpack.c.bf16 %v1663, %v1663
    %v1675 = vsel %vm307, %v1666, 0
    %v1678 = vsel %vm597, %v1138, 0
    %1680 = vmatpush.bf16.msra.mxu0 0
    %1681 = vmatpush.bf16.msra.mxu0 0
    %1682 = vmatpush.bf16.msra.mxu0 0
    %1683 = vmatpush.bf16.msra.mxu0 0
    %1684 = vmatpush.bf16.msra.mxu0 0
    %1685 = vmatpush.bf16.msra.mxu0 0
    %1686 = vmatpush.bf16.msra.mxu0 0
    %1687 = vmatpush.bf16.msra.mxu0 %v1678
    %1688 = vmatmul.bf16.gmra.mxu0 %v1675
    %v1689 = vpop.f32.mrf.mxu0
    %v1690 = vadd.f32 0.0, %v1689
    %v1691 = vpop.f32.mrf.mxu0
    %1692 = vdwg.mxu0
    %v1694 = vsel %vm307, %v1667, 0
    %v1697 = vsel %vm597, %v1139, 0
    %1699 = vmatpush.bf16.msra.mxu0 0
    %1700 = vmatpush.bf16.msra.mxu0 0
    %1701 = vmatpush.bf16.msra.mxu0 0
    %1702 = vmatpush.bf16.msra.mxu0 0
    %1703 = vmatpush.bf16.msra.mxu0 0
    %1704 = vmatpush.bf16.msra.mxu0 0
    %1705 = vmatpush.bf16.msra.mxu0 0
    %1706 = vmatpush.bf16.msra.mxu0 %v1697
    %1707 = vmatmul.bf16.gmra.mxu0 %v1694
    %v1708 = vpop.f32.mrf.mxu0
    %v1709 = vadd.f32 0.0, %v1708
    %v1710 = vpop.f32.mrf.mxu0
    %1711 = vdwg.mxu0
    %v1713 = vsel %vm307, %v1668, 0
    %v1716 = vsel %vm597, %v1140, 0
    %1718 = vmatpush.bf16.msra.mxu0 0
    %1719 = vmatpush.bf16.msra.mxu0 0
    %1720 = vmatpush.bf16.msra.mxu0 0
    %1721 = vmatpush.bf16.msra.mxu0 0
    %1722 = vmatpush.bf16.msra.mxu0 0
    %1723 = vmatpush.bf16.msra.mxu0 0
    %1724 = vmatpush.bf16.msra.mxu0 0
    %1725 = vmatpush.bf16.msra.mxu0 %v1716
    %1726 = vmatmul.bf16.gmra.mxu0 %v1713
    %v1727 = vpop.f32.mrf.mxu0
    %v1728 = vadd.f32 0.0, %v1727
    %v1729 = vpop.f32.mrf.mxu0
    %1730 = vdwg.mxu0
    %v1732 = vsel %vm307, %v1669, 0
    %v1735 = vsel %vm597, %v1141, 0
    %1737 = vmatpush.bf16.msra.mxu0 0
    %1738 = vmatpush.bf16.msra.mxu0 0
    %1739 = vmatpush.bf16.msra.mxu0 0
    %1740 = vmatpush.bf16.msra.mxu0 0
    %1741 = vmatpush.bf16.msra.mxu0 0
    %1742 = vmatpush.bf16.msra.mxu0 0
    %1743 = vmatpush.bf16.msra.mxu0 0
    %1744 = vmatpush.bf16.msra.mxu0 %v1735
    %1745 = vmatmul.bf16.gmra.mxu0 %v1732
    %v1746 = vpop.f32.mrf.mxu0
    %v1747 = vadd.f32 0.0, %v1746
    %v1748 = vpop.f32.mrf.mxu0
    %1749 = vdwg.mxu0
    %v1751 = vsel %vm307, %v1670, 0
    %v1754 = vsel %vm597, %v1142, 0
    %1756 = vmatpush.bf16.msra.mxu0 0
    %1757 = vmatpush.bf16.msra.mxu0 0
    %1758 = vmatpush.bf16.msra.mxu0 0
    %1759 = vmatpush.bf16.msra.mxu0 0
    %1760 = vmatpush.bf16.msra.mxu0 0
    %1761 = vmatpush.bf16.msra.mxu0 0
    %1762 = vmatpush.bf16.msra.mxu0 0
    %1763 = vmatpush.bf16.msra.mxu0 %v1754
    %1764 = vmatmul.bf16.gmra.mxu0 %v1751
    %v1765 = vpop.f32.mrf.mxu0
    %v1766 = vadd.f32 0.0, %v1765
    %v1767 = vpop.f32.mrf.mxu0
    %1768 = vdwg.mxu0
    %v1770 = vsel %vm307, %v1671, 0
    %v1773 = vsel %vm597, %v1143, 0
    %1775 = vmatpush.bf16.msra.mxu0 0
    %1776 = vmatpush.bf16.msra.mxu0 0
    %1777 = vmatpush.bf16.msra.mxu0 0
    %1778 = vmatpush.bf16.msra.mxu0 0
    %1779 = vmatpush.bf16.msra.mxu0 0
    %1780 = vmatpush.bf16.msra.mxu0 0
    %1781 = vmatpush.bf16.msra.mxu0 0
    %1782 = vmatpush.bf16.msra.mxu0 %v1773
    %1783 = vmatmul.bf16.gmra.mxu0 %v1770
    %v1784 = vpop.f32.mrf.mxu0
    %v1785 = vadd.f32 0.0, %v1784
    %v1786 = vpop.f32.mrf.mxu0
    %1787 = vdwg.mxu0
    %v1789 = vsel %vm307, %v1672, 0
    %v1792 = vsel %vm597, %v1144, 0
    %1794 = vmatpush.bf16.msra.mxu0 0
    %1795 = vmatpush.bf16.msra.mxu0 0
    %1796 = vmatpush.bf16.msra.mxu0 0
    %1797 = vmatpush.bf16.msra.mxu0 0
    %1798 = vmatpush.bf16.msra.mxu0 0
    %1799 = vmatpush.bf16.msra.mxu0 0
    %1800 = vmatpush.bf16.msra.mxu0 0
    %1801 = vmatpush.bf16.msra.mxu0 %v1792
    %1802 = vmatmul.bf16.gmra.mxu0 %v1789
    %v1803 = vpop.f32.mrf.mxu0
    %v1804 = vadd.f32 0.0, %v1803
    %v1805 = vpop.f32.mrf.mxu0
    %1806 = vdwg.mxu0
    %v1808 = vsel %vm307, %v1673, 0
    %v1811 = vsel %vm597, %v1145, 0
    %1813 = vmatpush.bf16.msra.mxu0 0
    %1814 = vmatpush.bf16.msra.mxu0 0
    %1815 = vmatpush.bf16.msra.mxu0 0
    %1816 = vmatpush.bf16.msra.mxu0 0
    %1817 = vmatpush.bf16.msra.mxu0 0
    %1818 = vmatpush.bf16.msra.mxu0 0
    %1819 = vmatpush.bf16.msra.mxu0 0
    %1820 = vmatpush.bf16.msra.mxu0 %v1811
    %1821 = vmatmul.bf16.gmra.mxu0 %v1808
    %v1822 = vpop.f32.mrf.mxu0
    %v1823 = vadd.f32 0.0, %v1822
    %v1824 = vpop.f32.mrf.mxu0
    %1825 = vdwg.mxu0
    %v1826 = vsel %vm194, %v1690, 0.0
    %v1827 = vsel %vm194, %v1728, 0.0
    %v1828 = vadd.f32 %v1826, %v1827
    %v1829 = vsel %vm194, %v1766, 0.0
    %v1830 = vadd.f32 %v1828, %v1829
    %v1831 = vsel %vm194, %v1804, 0.0
    %v1832 = vadd.f32 %v1830, %v1831
    %v1833 = vsel %vm194, %v1709, 0.0
    %v1834 = vsel %vm194, %v1747, 0.0
    %v1835 = vadd.f32 %v1833, %v1834
    %v1836 = vsel %vm194, %v1785, 0.0
    %v1837 = vadd.f32 %v1835, %v1836
    %v1838 = vsel %vm194, %v1823, 0.0
    %v1839 = vadd.f32 %v1837, %v1838
    %v1840 = vperm.slane %v1156, 0
    %v1841 = vadd.f32 %v1832, %v1840
    %v1842 = vadd.f32 %v1839, %v1840
    %v1843 = vadd.f32 %v1126, %v1841
    %v1844 = vadd.f32 %v1127, %v1842
    %v1845 = vsel %vm194, %v1843, 0.0
    %1846 = vadd.xlane.f32.xlu0 %v1845
    %v1847 = vpop.xlane.xlu0 %1846
    %v1848 = vsel %vm194, %v1844, 0.0
    %1849 = vadd.xlane.f32.xlu0 %v1848
    %v1850 = vpop.xlane.xlu0 %1849
    %v1851 = vmul.f32 %v1847, %v952
    %v1852 = vmul.f32 %v1850, %v952
    %v1853 = vsub.f32 %v1843, %v1851
    %v1854 = vsub.f32 %v1844, %v1852
    %v1855 = vmul.f32 %v1853, %v1853
    %v1856 = vmul.f32 %v1854, %v1854
    %v1857 = vsel %vm194, %v1855, 0.0
    %1858 = vadd.xlane.f32.xlu0 %v1857
    %v1859 = vpop.xlane.xlu0 %1858
    %v1860 = vsel %vm194, %v1856, 0.0
    %1861 = vadd.xlane.f32.xlu0 %v1860
    %v1862 = vpop.xlane.xlu0 %1861
    %v1863 = vmul.f32 %v1859, %v952
    %v1864 = vmul.f32 %v1862, %v952
    %v1865 = vadd.f32 %v1863, 1e-05
    %v1866 = vadd.f32 %v1864, 1e-05
    %v1867 = vrsqrt.pop %v1865
    %v1868 = vmul.f32 %v1867, %v1865
    %v1869 = vmul.f32 %v1868, %v1867
    %v1870 = vmul.f32 0.5, %v1869
    %v1871 = vsub.f32 1.5, %v1870
    %v1872 = vmul.f32 %v1867, %v1871
    %vm1873 = vweird.f32 %v1865
    %vm1874 = vweird.f32 %v1867
    %vm1875 = vmor %vm1873, %vm1874
    %v1876 = vsel %vm1875, %v1867, %v1872
    %v1877 = vrsqrt.pop %v1866
    %v1878 = vmul.f32 %v1877, %v1866
    %v1879 = vmul.f32 %v1878, %v1877
    %v1880 = vmul.f32 0.5, %v1879
    %v1881 = vsub.f32 1.5, %v1880
    %v1882 = vmul.f32 %v1877, %v1881
    %vm1883 = vweird.f32 %v1866
    %vm1884 = vweird.f32 %v1877
    %vm1885 = vmor %vm1883, %vm1884
    %v1886 = vsel %vm1885, %v1877, %v1882
    %v1887 = vmul.f32 %v1853, %v1876
    %v1888 = vmul.f32 %v1854, %v1886
    %v1889 = vperm.slane %v1157, 0
    %v1890 = vmul.f32 %v1887, %v1889
    %v1891 = vmul.f32 %v1888, %v1889
    %v1892 = vperm.slane %v1158, 0
    %v1893 = vadd.f32 %v1890, %v1892
    %v1894 = vadd.f32 %v1891, %v1892
    %v1895 = vpack.c.bf16 %v1894, %v1893
    %v1897 = vperm.slane %v1163, 0
    %v1903 = vunpack.c.l.b16 %v1133
    %v1904 = vunpack.c.l.b16 %v1134
    %v1905 = vunpack.c.l.b16 %v1135
    %v1906 = vunpack.c.l.b16 %v1136
    %v1907 = vpack.c.b16 %v1904, %v1903
    %v1908 = vpack.c.b16 %v1906, %v1905
    %v1912 = vsel %vm194, %v1895, 0
    %1914 = vmatpush.bf16.msra.mxu0 0
    %1915 = vmatpush.bf16.msra.mxu0 0
    %1916 = vmatpush.bf16.msra.mxu0 0
    %1917 = vmatpush.bf16.msra.mxu0 0
    %1918 = vmatpush.bf16.msra.mxu0 0
    %1919 = vmatpush.bf16.msra.mxu0 0
    %1920 = vmatpush.bf16.msra.mxu0 %v1908
    %1921 = vmatpush.bf16.msra.mxu0 %v1907
    %1922 = vmatmul.bf16.gmra.mxu0 %v1912
    %v1923 = vpop.f32.mrf.mxu0
    %v1924 = vadd.f32 %v1897, %v1923
    %v1925 = vpop.f32.mrf.mxu0
    %v1926 = vadd.f32 %v1897, %v1925
    %1927 = vdwg.mxu0
    %v1928 = vmax.f32 %v1924, 0.0
    %v1929 = vmax.f32 %v1926, 0.0
    %v1930 = vpack.c.bf16 %v1929, %v1928
    %v1931 = vperm.slane %v1159, 0
    %v1940 = vunpack.c.l.b16 %v1147
    %v1941 = vunpack.c.l.b16 %v1148
    %v1942 = vunpack.c.l.b16 %v1149
    %v1943 = vunpack.c.l.b16 %v1150
    %v1944 = vunpack.c.l.b16 %v1151
    %v1945 = vunpack.c.l.b16 %v1152
    %v1946 = vunpack.c.l.b16 %v1153
    %v1947 = vunpack.c.l.b16 %v1154
    %v1948 = vpack.c.b16 %v1941, %v1940
    %v1949 = vpack.c.b16 %v1943, %v1942
    %v1950 = vpack.c.b16 %v1945, %v1944
    %v1951 = vpack.c.b16 %v1947, %v1946
    %v1957 = vsel %vm1058, %v1930, 0
    %1959 = vmatpush.bf16.msra.mxu0 0
    %1960 = vmatpush.bf16.msra.mxu0 0
    %1961 = vmatpush.bf16.msra.mxu0 0
    %1962 = vmatpush.bf16.msra.mxu0 0
    %1963 = vmatpush.bf16.msra.mxu0 %v1951
    %1964 = vmatpush.bf16.msra.mxu0 %v1950
    %1965 = vmatpush.bf16.msra.mxu0 %v1949
    %1966 = vmatpush.bf16.msra.mxu0 %v1948
    %1967 = vmatmul.bf16.gmra.mxu0 %v1957
    %v1968 = vpop.f32.mrf.mxu0
    %v1969 = vadd.f32 %v1931, %v1968
    %v1970 = vpop.f32.mrf.mxu0
    %v1971 = vadd.f32 %v1931, %v1970
    %1972 = vdwg.mxu0
    %v1973 = vadd.f32 %v1893, %v1969
    %v1974 = vadd.f32 %v1894, %v1971
    %v1975 = vsel %vm194, %v1973, 0.0
    %1976 = vadd.xlane.f32.xlu0 %v1975
    %v1977 = vpop.xlane.xlu0 %1976
    %v1978 = vsel %vm194, %v1974, 0.0
    %1979 = vadd.xlane.f32.xlu0 %v1978
    %v1980 = vpop.xlane.xlu0 %1979
    %v1981 = vmul.f32 %v1977, %v952
    %v1982 = vmul.f32 %v1980, %v952
    %v1983 = vsub.f32 %v1973, %v1981
    %v1984 = vsub.f32 %v1974, %v1982
    %v1985 = vmul.f32 %v1983, %v1983
    %v1986 = vmul.f32 %v1984, %v1984
    %v1987 = vsel %vm194, %v1985, 0.0
    %1988 = vadd.xlane.f32.xlu0 %v1987
    %v1989 = vpop.xlane.xlu0 %1988
    %v1990 = vsel %vm194, %v1986, 0.0
    %1991 = vadd.xlane.f32.xlu0 %v1990
    %v1992 = vpop.xlane.xlu0 %1991
    %v1993 = vmul.f32 %v1989, %v952
    %v1994 = vmul.f32 %v1992, %v952
    %v1995 = vadd.f32 %v1993, 1e-05
    %v1996 = vadd.f32 %v1994, 1e-05
    %v1997 = vrsqrt.pop %v1995
    %v1998 = vmul.f32 %v1997, %v1995
    %v1999 = vmul.f32 %v1998, %v1997
    %v2000 = vmul.f32 0.5, %v1999
    %v2001 = vsub.f32 1.5, %v2000
    %v2002 = vmul.f32 %v1997, %v2001
    %vm2003 = vweird.f32 %v1995
    %vm2004 = vweird.f32 %v1997
    %vm2005 = vmor %vm2003, %vm2004
    %v2006 = vsel %vm2005, %v1997, %v2002
    %v2007 = vrsqrt.pop %v1996
    %v2008 = vmul.f32 %v2007, %v1996
    %v2009 = vmul.f32 %v2008, %v2007
    %v2010 = vmul.f32 0.5, %v2009
    %v2011 = vsub.f32 1.5, %v2010
    %v2012 = vmul.f32 %v2007, %v2011
    %vm2013 = vweird.f32 %v1996
    %vm2014 = vweird.f32 %v2007
    %vm2015 = vmor %vm2013, %vm2014
    %v2016 = vsel %vm2015, %v2007, %v2012
    %v2017 = vmul.f32 %v1983, %v2006
    %v2018 = vmul.f32 %v1984, %v2016
    %v2019 = vperm.slane %v1160, 0
    %v2020 = vmul.f32 %v2017, %v2019
    %v2021 = vmul.f32 %v2018, %v2019
    %v2022 = vperm.slane %v1161, 0
    %v2023 = vadd.f32 %v2020, %v2022
    %v2024 = vadd.f32 %v2021, %v2022
    %v2025 = vrot.slane %v2023, 4
    %v2026 = vsel %vm75, 0.0, %v2025
    %v2028 = vunpack.c.l.s4 1983009808
    %v2029 = vunpack.c.0.s8 %v2028
    %v2030 = vperm.slane %v2023, %v2029
    %v2032 = vunpack.c.l.s4 1983009808
    %v2033 = vunpack.c.0.s8 %v2032
    %v2034 = vperm.slane %v2026, %v2033
    %v2035 = vrot.slane %v2024, 4
    %v2036 = vsel %vm75, 0.0, %v2035
    %v2038 = vunpack.c.l.s4 1983009808
    %v2039 = vunpack.c.0.s8 %v2038
    %v2040 = vperm.slane %v2024, %v2039
    %v2042 = vunpack.c.l.s4 1983009808
    %v2043 = vunpack.c.0.s8 %v2042
    %v2044 = vperm.slane %v2036, %v2043
    %v2045 = vrot.slane %v2040, 4
    %v2046 = vsel %vm75, %v2045, %v2030
    %v2047 = vrot.slane %v2030, 4
    %v2048 = vsel %vm75, %v2040, %v2047
    %v2050 = vunpack.c.l.s4 1934713408
    %v2051 = vunpack.c.0.s8 %v2050
    %v2052 = vperm.slane %v2046, %v2051
    %v2054 = vunpack.c.l.s4 1934713408
    %v2055 = vunpack.c.0.s8 %v2054
    %v2056 = vperm.slane %v2048, %v2055
    %v2057 = vrot.slane %v2044, 4
    %v2058 = vsel %vm75, %v2057, %v2034
    %v2059 = vrot.slane %v2034, 4
    %v2060 = vsel %vm75, %v2044, %v2059
    %v2062 = vunpack.c.l.s4 1934713408
    %v2063 = vunpack.c.0.s8 %v2062
    %v2064 = vperm.slane %v2058, %v2063
    %v2066 = vunpack.c.l.s4 1934713408
    %v2067 = vunpack.c.0.s8 %v2066
    %v2068 = vperm.slane %v2060, %v2067
    %v2069 = vrot.slane %v2052, 4
    %v2070 = vsel %vm75, 0.0, %v2069
    %v2071 = vrot.slane %v2056, 4
    %v2072 = vsel %vm75, 0.0, %v2071
    %v2073 = vrot.slane %v2064, 4
    %v2074 = vsel %vm75, 0.0, %v2073
    %v2075 = vrot.slane %v2068, 4
    %v2076 = vsel %vm75, 0.0, %v2075
    %vm2077 = vcmask 254976
    %2078 = vst.msk [vmem:[#allocation7] sm:$0x3] %vm2077, %v2052
    %2079 = vst.msk [vmem:[#allocation7 + $0x2] sm:$0x3] %vm2077, %v2070
    %2080 = vst.msk [vmem:[#allocation7 + $0x4] sm:$0x3] %vm2077, %v2056
    %2081 = vst.msk [vmem:[#allocation7 + $0x6] sm:$0x3] %vm2077, %v2072
    %2082 = vst.msk [vmem:[#allocation7 + $0x8] sm:$0x3] %vm2077, %v2064
    %2083 = vst.msk [vmem:[#allocation7 + $0xa] sm:$0x3] %vm2077, %v2074
    %2084 = vst.msk [vmem:[#allocation7 + $0xc] sm:$0x3] %vm2077, %v2068
    %2085 = vst.msk [vmem:[#allocation7 + $0xe] sm:$0x3] %vm2077, %v2076
    // Predicated region
    $region46: #{tpu_custom_call.1} parent=1 // pred_check
      _
    $region47: #{tpu_custom_call.1} parent=1 // pred_check_branch
      %2087 = sbr.rel (0) target = $region49
    $region48: #{tpu_custom_call.1} parent=1 // pred_region
      %2089 = vsyncadd [#allocation4], 0
      %s2090 = sshll.u32 [#allocation7], 4
      %s2091 = int_to_ptr.vmem [resolvable:$true] %s2090
      %s2092 = sshll.u32 %s9, 4
      %s2093 = int_to_ptr.hbm [resolvable:$true] %s2092
      %2098 = dma.vmem_to_hbm [thread:$0]  %s2091, 256, %s2093, [#allocation4], 32, 32, 2
    $region49: #{tpu_custom_call.1} parent=1 // pred_fallthru
      _
    // Predicated region
    $region50: #{tpu_custom_call.1} parent=1 // pred_check
      _
    $region51: #{tpu_custom_call.1} parent=1 // pred_check_branch
      %2100 = sbr.rel (0) target = $region53
    $region52: #{tpu_custom_call.1} parent=1 // pred_region
      %2102 = dma.done [#allocation4], 256
    $region53: #{tpu_custom_call.1} parent=1 // pred_fallthru
      _
    %2103 = vsyncpa [#allocation3], 1
    %2104 = vsyncpa [#allocation6], 1
    %2105 = vsyncpa [#allocation4], 1

</llo_original>
